<compile_context>
chip_gen: v7x
topology: tpu7x:2x2x1
jax: 0.10.0
libtpu: 0.0.40
codegen_flags: <defaults>
</compile_context>

<pallas_src>
import functools

import jax
import jax.numpy as jnp
import numpy as np
from jax import lax
from jax.experimental import pallas as pl
from jax.experimental.pallas import tpu as pltpu  # noqa: F401  (TPU backend; specs default to full-array VMEM blocks)


def _encode_kernel(N, pats_ref, w_ref, b_ref, act_ref, delta_ref):
    # pats_ref : (K, B*N)  im2col patches, batch folded into the lane axis
    # w_ref    : (C, K)    conv weight as a matmul operand
    # b_ref    : (C, 1)    conv bias
    # act_ref  : (C, B*N)  relu'd, spatially L2-normalized activations (lane-dense)
    # delta_ref: (N, N)    Hebbian delta = 0.001 * mean_c( sum_b outer(act[b,c], act[b,c]) )
    C = w_ref.shape[0]
    B = pats_ref.shape[1] // N

    # Whole conv in one MXU matmul (no per-batch grid steps).
    y = jnp.dot(w_ref[...], pats_ref[...], preferred_element_type=jnp.float32)  # (C, B*N)
    y = jnp.maximum(y + b_ref[...], 0.0)

    segs = []
    gram = jnp.zeros((N, N), jnp.float32)
    for b in range(B):  # static unroll over the (small) batch
        seg = y[:, b * N:(b + 1) * N]                                  # (C, N)
        nrm = jnp.sqrt(jnp.sum(seg * seg, axis=1, keepdims=True))      # (C, 1)
        a = seg / (nrm + 1e-6)                                         # (C, N)
        segs.append(a)
        # gram += a^T a  (contract over the channel axis) -- one small 2-D matmul per b.
        gram = gram + lax.dot_general(a, a, (((0,), (0,)), ((), ())),
                                      preferred_element_type=jnp.float32)  # (N, N)

    act_ref[...] = jnp.concatenate(segs, axis=1)                       # (C, B*N)
    delta_ref[...] = (0.001 / C) * gram


def _lateral_kernel(act_ref, wlat_ref, delta_ref, wnew_ref, out_ref):
    # act_ref  : (C, B, N)  normalized activations
    # wlat_ref : (C, N, N)  old lateral weights
    # delta_ref: (N, N)     shared Hebbian delta (computed in the encode kernel)
    # wnew_ref : (C, N, N)  updated (clamped) lateral weights
    # out_ref  : (C, B, N)  act + spatially-centered lateral term
    C = wlat_ref.shape[0]
    delta = delta_ref[...]
    # All channels in ONE grid step (Cb = C): unrolled loop of tiny 2-D MXU matmuls.
    # No cross-channel dependency remains, so for large C this loop can be re-blocked
    # onto a "parallel" grid dimension without changing the body.
    for c in range(C):
        w_c = jnp.clip(wlat_ref[c] + delta, -1.0, 1.0)                 # (N, N)
        wnew_ref[c] = w_c
        a_c = act_ref[c]                                               # (B, N)
        lat = jnp.dot(a_c, w_c, preferred_element_type=jnp.float32)    # (B, N)
        lat = lat - jnp.mean(lat, axis=1, keepdims=True)               # spatial mean-sub
        out_ref[c] = a_c + lat


def hebbian_encoder_forward(x, conv_w, conv_b, lateral_w):
    """Returns (act_out: (B, C, H, W), updated lateral weights: (C, N, N))."""
    B, Cin, Hin, Win = x.shape
    Cout = conv_w.shape[0]
    H = (Hin + 2 - 3) // 2 + 1
    W = (Win + 2 - 3) // 2 + 1
    N = H * W
    K = Cin * 9

    # --- im2col glue (plain JAX): pats2[ci*9 + kh*3 + kw, b*N + oh*W + ow] ---
    # TODO(synk): for large H,W fuse the im2col into the encode kernel (9 shifted
    # matmuls / prefetch-indexed gather) instead of materializing the 9x patches tensor.
    xp = jnp.pad(x, ((0, 0), (0, 0), (1, 1), (1, 1)))
    cols = [xp[:, :, kh:kh + 2 * H - 1:2, kw:kw + 2 * W - 1:2]
            for kh in range(3) for kw in range(3)]
    pats = jnp.stack(cols, axis=2)                                     # (B, Cin, 9, H, W)
    pats2 = jnp.transpose(pats, (1, 2, 0, 3, 4)).reshape(K, B * N)     # (K, B*N)
    w_mat = conv_w.reshape(Cout, K)                                    # (C, K)
    b_col = conv_b.reshape(Cout, 1)                                    # (C, 1)

    # --- kernel 1 (single step): conv + bias + relu + spatial L2 norm + Hebbian delta ---
    act2d, delta = pl.pallas_call(
        functools.partial(_encode_kernel, N),
        out_shape=(jax.ShapeDtypeStruct((Cout, B * N), jnp.float32),
                   jax.ShapeDtypeStruct((N, N), jnp.float32)),
    )(pats2, w_mat, b_col)

    # Free metadata reshape (row-major compatible): (C, B*N) -> (C, B, N).
    act_cbn = act2d.reshape(Cout, B, N)

    # --- kernel 2 (single step): weight update + clamp + per-channel lateral term ---
    w_new, out_cbn = pl.pallas_call(
        _lateral_kernel,
        out_shape=(jax.ShapeDtypeStruct((Cout, N, N), jnp.float32),
                   jax.ShapeDtypeStruct((Cout, B, N), jnp.float32)),
    )(act_cbn, lateral_w, delta)

    # Tiny (B*C*N elements) layout fix-up of the final output only.
    act_out = jnp.transpose(out_cbn, (1, 0, 2)).reshape(B, Cout, H, W)
    return act_out, w_new


def reference(x, conv_w, conv_b, lateral_w):
    """Pure-JAX reference reproducing the PyTorch forward semantics."""
    y = lax.conv_general_dilated(
        x, conv_w, window_strides=(2, 2), padding=((1, 1), (1, 1)),
        dimension_numbers=("NCHW", "OIHW", "NCHW"),
        precision=lax.Precision.HIGHEST)
    y = y + conv_b[None, :, None, None]
    act = jnp.maximum(y, 0.0)
    nrm = jnp.sqrt(jnp.sum(act * act, axis=(2, 3), keepdims=True))
    act = act / (nrm + 1e-6)
    B, C, H, W = act.shape
    af = act.reshape(B, C, H * W)
    heb = jnp.einsum("bni,bnj->nij", af, af, precision=lax.Precision.HIGHEST)
    delta = 0.001 * heb.mean(axis=0)
    w_new = jnp.clip(lateral_w + delta, -1.0, 1.0)
    lat = jnp.einsum("bci,cij->bcj", af, w_new, precision=lax.Precision.HIGHEST)
    lat = lat.reshape(B, C, H, W)
    lat = lat - lat.mean(axis=(2, 3), keepdims=True)
    return af.reshape(B, C, H, W) + lat, w_new
    # TODO(synk): the PyTorch step-logging print is a host side-effect; omitted.


if __name__ == "__main__":
    key = jax.random.PRNGKey(0)
    k1, k2, k3 = jax.random.split(key, 3)

    B, Cin, Hin, Win = 2, 4, 16, 16
    Cout = 8
    H, W = Hin // 2, Win // 2          # conv k=3, stride=2, pad=1 -> 8x8
    N = H * W                          # module arg spatial=(H, W)

    x = jax.random.normal(k1, (B, Cin, Hin, Win), dtype=jnp.float32)
    fan_in = Cin * 9
    conv_w = jax.random.uniform(k2, (Cout, Cin, 3, 3), jnp.float32,
                                minval=-1.0, maxval=1.0) / jnp.sqrt(fan_in)
    conv_b = jax.random.uniform(k3, (Cout,), jnp.float32, minval=-0.1, maxval=0.1)
    lateral_w = jnp.zeros((Cout, N, N), jnp.float32)   # module inits lateral to zeros

    fwd = jax.jit(hebbian_encoder_forward)
    act_out, w_new = jax.block_until_ready(fwd(x, conv_w, conv_b, lateral_w))

    ref_act, ref_w = reference(x, conv_w, conv_b, lateral_w)
    np.testing.assert_allclose(np.asarray(act_out), np.asarray(ref_act),
                               rtol=1e-2, atol=1e-4)
    np.testing.assert_allclose(np.asarray(w_new), np.asarray(ref_w),
                               rtol=1e-2, atol=1e-6)
    print("KERNEL_OK")
</pallas_src>

<mosaic_0001>
module attributes {stable_mosaic.version = 11 : i64} {
  func.func @_encode_kernel(%arg0: memref<36x128xf32, #tpu.memory_space<vmem>>, %arg1: memref<8x36xf32, #tpu.memory_space<vmem>>, %arg2: memref<8x1xf32, #tpu.memory_space<vmem>>, %arg3: memref<8x128xf32, #tpu.memory_space<vmem>>, %arg4: memref<64x64xf32, #tpu.memory_space<vmem>>) attributes {dimension_semantics = [], scalar_prefetch = 0 : i64, scratch_operands = 0 : i64, tpu.core_type = #tpu.core_type<tc>} {
    %c0 = arith.constant 0 : index
    %c0_0 = arith.constant 0 : index
    %0 = vector.load %arg1[%c0, %c0_0] : memref<8x36xf32, #tpu.memory_space<vmem>>, vector<8x36xf32>
    %c0_1 = arith.constant 0 : index
    %c0_2 = arith.constant 0 : index
    %1 = vector.load %arg0[%c0_1, %c0_2] : memref<36x128xf32, #tpu.memory_space<vmem>>, vector<36x128xf32>
    %cst = arith.constant dense<0.000000e+00> : vector<8x128xf32>
    %2 = tpu.matmul %0, %1, %cst {dimension_numbers = #tpu.dot_dimension_numbers<[1], [0], [0], [1], [0, 0, 1, 1], [], []>} : vector<8x36xf32>, vector<36x128xf32>, vector<8x128xf32> -> vector<8x128xf32>
    %c0_3 = arith.constant 0 : index
    %c0_4 = arith.constant 0 : index
    %3 = vector.load %arg2[%c0_3, %c0_4] : memref<8x1xf32, #tpu.memory_space<vmem>>, vector<8x1xf32>
    %4 = vector.broadcast %3 : vector<8x1xf32> to vector<8x128xf32>
    %5 = arith.addf %2, %4 : vector<8x128xf32>
    %cst_5 = arith.constant 0.000000e+00 : f32
    %6 = vector.broadcast %cst_5 : f32 to vector<8x128xf32>
    %7 = arith.maximumf %5, %6 : vector<8x128xf32>
    %cst_6 = arith.constant 0.000000e+00 : f32
    %8 = vector.broadcast %cst_6 : f32 to vector<64x64xf32>
    %9 = vector.extract_strided_slice %7 {offsets = [0, 0], sizes = [8, 64], strides = [1, 1]} : vector<8x128xf32> to vector<8x64xf32>
    %10 = arith.mulf %9, %9 : vector<8x64xf32>
    %cst_7 = arith.constant dense<0.000000e+00> : vector<8xf32>
    %11 = vector.multi_reduction <add>, %10, %cst_7 [1] : vector<8x64xf32> to vector<8xf32>
    %12 = vector.shape_cast %11 : vector<8xf32> to vector<8x1xf32>
    %13 = math.sqrt %12 : vector<8x1xf32>
    %cst_8 = arith.constant 9.99999997E-7 : f32
    %14 = vector.broadcast %cst_8 : f32 to vector<8x1xf32>
    %15 = arith.addf %13, %14 : vector<8x1xf32>
    %16 = vector.broadcast %15 : vector<8x1xf32> to vector<8x64xf32>
    %17 = arith.divf %9, %16 : vector<8x64xf32>
    %cst_9 = arith.constant dense<0.000000e+00> : vector<64x64xf32>
    %18 = tpu.matmul %17, %17, %cst_9 {dimension_numbers = #tpu.dot_dimension_numbers<[0], [0], [1], [1], [0, 1, 1, 1], [], []>} : vector<8x64xf32>, vector<8x64xf32>, vector<64x64xf32> -> vector<64x64xf32>
    %19 = arith.addf %8, %18 : vector<64x64xf32>
    %20 = vector.extract_strided_slice %7 {offsets = [0, 64], sizes = [8, 64], strides = [1, 1]} : vector<8x128xf32> to vector<8x64xf32>
    %21 = arith.mulf %20, %20 : vector<8x64xf32>
    %cst_10 = arith.constant dense<0.000000e+00> : vector<8xf32>
    %22 = vector.multi_reduction <add>, %21, %cst_10 [1] : vector<8x64xf32> to vector<8xf32>
    %23 = vector.shape_cast %22 : vector<8xf32> to vector<8x1xf32>
    %24 = math.sqrt %23 : vector<8x1xf32>
    %cst_11 = arith.constant 9.99999997E-7 : f32
    %25 = vector.broadcast %cst_11 : f32 to vector<8x1xf32>
    %26 = arith.addf %24, %25 : vector<8x1xf32>
    %27 = vector.broadcast %26 : vector<8x1xf32> to vector<8x64xf32>
    %28 = arith.divf %20, %27 : vector<8x64xf32>
    %cst_12 = arith.constant dense<0.000000e+00> : vector<64x64xf32>
    %29 = tpu.matmul %28, %28, %cst_12 {dimension_numbers = #tpu.dot_dimension_numbers<[0], [0], [1], [1], [0, 1, 1, 1], [], []>} : vector<8x64xf32>, vector<8x64xf32>, vector<64x64xf32> -> vector<64x64xf32>
    %30 = arith.addf %19, %29 : vector<64x64xf32>
    %31 = tpu.concatenate %17, %28 in 1 : vector<8x64xf32>, vector<8x64xf32> -> vector<8x128xf32>
    %c0_13 = arith.constant 0 : index
    %c0_14 = arith.constant 0 : index
    %32 = vector.load %arg3[%c0_13, %c0_14] : memref<8x128xf32, #tpu.memory_space<vmem>>, vector<8x128xf32>
    tpu.vector_store %arg3[%c0_13, %c0_14], %31 {strides = array<i32>} : memref<8x128xf32, #tpu.memory_space<vmem>>, vector<8x128xf32>,
    %cst_15 = arith.constant 1.250000e-04 : f32
    %33 = vector.broadcast %cst_15 : f32 to vector<64x64xf32>
    %34 = arith.mulf %33, %30 : vector<64x64xf32>
    %c0_16 = arith.constant 0 : index
    %c0_17 = arith.constant 0 : index
    %35 = vector.load %arg4[%c0_16, %c0_17] : memref<64x64xf32, #tpu.memory_space<vmem>>, vector<64x64xf32>
    tpu.vector_store %arg4[%c0_16, %c0_17], %34 {strides = array<i32>} : memref<64x64xf32, #tpu.memory_space<vmem>>, vector<64x64xf32>,
    return
  }
}

module attributes {stable_mosaic.version = 11 : i64} {
  func.func @_lateral_kernel(%arg0: memref<8x2x64xf32, #tpu.memory_space<vmem>>, %arg1: memref<8x64x64xf32, #tpu.memory_space<vmem>>, %arg2: memref<64x64xf32, #tpu.memory_space<vmem>>, %arg3: memref<8x64x64xf32, #tpu.memory_space<vmem>>, %arg4: memref<8x2x64xf32, #tpu.memory_space<vmem>>) attributes {dimension_semantics = [], scalar_prefetch = 0 : i64, scratch_operands = 0 : i64, tpu.core_type = #tpu.core_type<tc>} {
    %c0 = arith.constant 0 : index
    %c0_0 = arith.constant 0 : index
    %0 = vector.load %arg2[%c0, %c0_0] : memref<64x64xf32, #tpu.memory_space<vmem>>, vector<64x64xf32>
    %c0_1 = arith.constant 0 : index
    %c0_2 = arith.constant 0 : index
    %c0_3 = arith.constant 0 : index
    %1 = vector.load %arg1[%c0_1, %c0_2, %c0_3] : memref<8x64x64xf32, #tpu.memory_space<vmem>>, vector<1x64x64xf32>
    %2 = vector.shape_cast %1 : vector<1x64x64xf32> to vector<64x64xf32>
    %3 = arith.addf %2, %0 : vector<64x64xf32>
    %cst = arith.constant -1.000000e+00 : f32
    %cst_4 = arith.constant 1.000000e+00 : f32
    %4 = vector.broadcast %cst : f32 to vector<64x64xf32>
    %5 = arith.maximumf %4, %3 : vector<64x64xf32>
    %6 = vector.broadcast %cst_4 : f32 to vector<64x64xf32>
    %7 = arith.minimumf %6, %5 : vector<64x64xf32>
    %c0_5 = arith.constant 0 : index
    %c0_6 = arith.constant 0 : index
    %c0_7 = arith.constant 0 : index
    %8 = vector.load %arg3[%c0_5, %c0_6, %c0_7] : memref<8x64x64xf32, #tpu.memory_space<vmem>>, vector<1x64x64xf32>
    %9 = vector.shape_cast %8 : vector<1x64x64xf32> to vector<64x64xf32>
    %10 = vector.shape_cast %7 : vector<64x64xf32> to vector<1x64x64xf32>
    tpu.vector_store %arg3[%c0_5, %c0_6, %c0_7], %10 {strides = array<i32>} : memref<8x64x64xf32, #tpu.memory_space<vmem>>, vector<1x64x64xf32>,
    %c0_8 = arith.constant 0 : index
    %c0_9 = arith.constant 0 : index
    %c0_10 = arith.constant 0 : index
    %11 = vector.load %arg0[%c0_8, %c0_9, %c0_10] : memref<8x2x64xf32, #tpu.memory_space<vmem>>, vector<1x2x64xf32>
    %12 = vector.shape_cast %11 : vector<1x2x64xf32> to vector<2x64xf32>
    %cst_11 = arith.constant dense<0.000000e+00> : vector<2x64xf32>
    %13 = tpu.matmul %12, %7, %cst_11 {dimension_numbers = #tpu.dot_dimension_numbers<[1], [0], [0], [1], [0, 0, 1, 1], [], []>} : vector<2x64xf32>, vector<64x64xf32>, vector<2x64xf32> -> vector<2x64xf32>
    %cst_12 = arith.constant dense<0.000000e+00> : vector<2xf32>
    %14 = vector.multi_reduction <add>, %13, %cst_12 [1] : vector<2x64xf32> to vector<2xf32>
    %15 = vector.shape_cast %14 : vector<2xf32> to vector<2x1xf32>
    %cst_13 = arith.constant 6.400000e+01 : f32
    %16 = vector.broadcast %cst_13 : f32 to vector<2x1xf32>
    %17 = arith.divf %15, %16 : vector<2x1xf32>
    %18 = vector.broadcast %17 : vector<2x1xf32> to vector<2x64xf32>
    %19 = arith.subf %13, %18 : vector<2x64xf32>
    %20 = arith.addf %12, %19 : vector<2x64xf32>
    %c0_14 = arith.constant 0 : index
    %c0_15 = arith.constant 0 : index
    %c0_16 = arith.constant 0 : index
    %21 = vector.load %arg4[%c0_14, %c0_15, %c0_16] : memref<8x2x64xf32, #tpu.memory_space<vmem>>, vector<1x2x64xf32>
    %22 = vector.shape_cast %21 : vector<1x2x64xf32> to vector<2x64xf32>
    %23 = vector.shape_cast %20 : vector<2x64xf32> to vector<1x2x64xf32>
    tpu.vector_store %arg4[%c0_14, %c0_15, %c0_16], %23 {strides = array<i32>} : memref<8x2x64xf32, #tpu.memory_space<vmem>>, vector<1x2x64xf32>,
    %c1 = arith.constant 1 : index
    %c0_17 = arith.constant 0 : index
    %c0_18 = arith.constant 0 : index
    %24 = vector.load %arg1[%c1, %c0_17, %c0_18] : memref<8x64x64xf32, #tpu.memory_space<vmem>>, vector<1x64x64xf32>
    %25 = vector.shape_cast %24 : vector<1x64x64xf32> to vector<64x64xf32>
    %26 = arith.addf %25, %0 : vector<64x64xf32>
    %cst_19 = arith.constant -1.000000e+00 : f32
    %cst_20 = arith.constant 1.000000e+00 : f32
    %27 = vector.broadcast %cst_19 : f32 to vector<64x64xf32>
    %28 = arith.maximumf %27, %26 : vector<64x64xf32>
    %29 = vector.broadcast %cst_20 : f32 to vector<64x64xf32>
    %30 = arith.minimumf %29, %28 : vector<64x64xf32>
    %c1_21 = arith.constant 1 : index
    %c0_22 = arith.constant 0 : index
    %c0_23 = arith.constant 0 : index
    %31 = vector.load %arg3[%c1_21, %c0_22, %c0_23] : memref<8x64x64xf32, #tpu.memory_space<vmem>>, vector<1x64x64xf32>
    %32 = vector.shape_cast %31 : vector<1x64x64xf32> to vector<64x64xf32>
    %33 = vector.shape_cast %30 : vector<64x64xf32> to vector<1x64x64xf32>
    tpu.vector_store %arg3[%c1_21, %c0_22, %c0_23], %33 {strides = array<i32>} : memref<8x64x64xf32, #tpu.memory_space<vmem>>, vector<1x64x64xf32>,
    %c1_24 = arith.constant 1 : index
    %c0_25 = arith.constant 0 : index
    %c0_26 = arith.constant 0 : index
    %34 = vector.load %arg0[%c1_24, %c0_25, %c0_26] : memref<8x2x64xf32, #tpu.memory_space<vmem>>, vector<1x2x64xf32>
    %35 = vector.shape_cast %34 : vector<1x2x64xf32> to vector<2x64xf32>
    %cst_27 = arith.constant dense<0.000000e+00> : vector<2x64xf32>
    %36 = tpu.matmul %35, %30, %cst_27 {dimension_numbers = #tpu.dot_dimension_numbers<[1], [0], [0], [1], [0, 0, 1, 1], [], []>} : vector<2x64xf32>, vector<64x64xf32>, vector<2x64xf32> -> vector<2x64xf32>
    %cst_28 = arith.constant dense<0.000000e+00> : vector<2xf32>
    %37 = vector.multi_reduction <add>, %36, %cst_28 [1] : vector<2x64xf32> to vector<2xf32>
    %38 = vector.shape_cast %37 : vector<2xf32> to vector<2x1xf32>
    %cst_29 = arith.constant 6.400000e+01 : f32
    %39 = vector.broadcast %cst_29 : f32 to vector<2x1xf32>
    %40 = arith.divf %38, %39 : vector<2x1xf32>
    %41 = vector.broadcast %40 : vector<2x1xf32> to vector<2x64xf32>
    %42 = arith.subf %36, %41 : vector<2x64xf32>
    %43 = arith.addf %35, %42 : vector<2x64xf32>
    %c1_30 = arith.constant 1 : index
    %c0_31 = arith.constant 0 : index
    %c0_32 = arith.constant 0 : index
    %44 = vector.load %arg4[%c1_30, %c0_31, %c0_32] : memref<8x2x64xf32, #tpu.memory_space<vmem>>, vector<1x2x64xf32>
    %45 = vector.shape_cast %44 : vector<1x2x64xf32> to vector<2x64xf32>
    %46 = vector.shape_cast %43 : vector<2x64xf32> to vector<1x2x64xf32>
    tpu.vector_store %arg4[%c1_30, %c0_31, %c0_32], %46 {strides = array<i32>} : memref<8x2x64xf32, #tpu.memory_space<vmem>>, vector<1x2x64xf32>,
    %c2 = arith.constant 2 : index
    %c0_33 = arith.constant 0 : index
    %c0_34 = arith.constant 0 : index
    %47 = vector.load %arg1[%c2, %c0_33, %c0_34] : memref<8x64x64xf32, #tpu.memory_space<vmem>>, vector<1x64x64xf32>
    %48 = vector.shape_cast %47 : vector<1x64x64xf32> to vector<64x64xf32>
    %49 = arith.addf %48, %0 : vector<64x64xf32>
    %cst_35 = arith.constant -1.000000e+00 : f32
    %cst_36 = arith.constant 1.000000e+00 : f32
    %50 = vector.broadcast %cst_35 : f32 to vector<64x64xf32>
    %51 = arith.maximumf %50, %49 : vector<64x64xf32>
    %52 = vector.broadcast %cst_36 : f32 to vector<64x64xf32>
    %53 = arith.minimumf %52, %51 : vector<64x64xf32>
    %c2_37 = arith.constant 2 : index
    %c0_38 = arith.constant 0 : index
    %c0_39 = arith.constant 0 : index
    %54 = vector.load %arg3[%c2_37, %c0_38, %c0_39] : memref<8x64x64xf32, #tpu.memory_space<vmem>>, vector<1x64x64xf32>
    %55 = vector.shape_cast %54 : vector<1x64x64xf32> to vector<64x64xf32>
    %56 = vector.shape_cast %53 : vector<64x64xf32> to vector<1x64x64xf32>
    tpu.vector_store %arg3[%c2_37, %c0_38, %c0_39], %56 {strides = array<i32>} : memref<8x64x64xf32, #tpu.memory_space<vmem>>, vector<1x64x64xf32>,
    %c2_40 = arith.constant 2 : index
    %c0_41 = arith.constant 0 : index
    %c0_42 = arith.constant 0 : index
    %57 = vector.load %arg0[%c2_40, %c0_41, %c0_42] : memref<8x2x64xf32, #tpu.memory_space<vmem>>, vector<1x2x64xf32>
    %58 = vector.shape_cast %57 : vector<1x2x64xf32> to vector<2x64xf32>
    %cst_43 = arith.constant dense<0.000000e+00> : vector<2x64xf32>
    %59 = tpu.matmul %58, %53, %cst_43 {dimension_numbers = #tpu.dot_dimension_numbers<[1], [0], [0], [1], [0, 0, 1, 1], [], []>} : vector<2x64xf32>, vector<64x64xf32>, vector<2x64xf32> -> vector<2x64xf32>
    %cst_44 = arith.constant dense<0.000000e+00> : vector<2xf32>
    %60 = vector.multi_reduction <add>, %59, %cst_44 [1] : vector<2x64xf32> to vector<2xf32>
    %61 = vector.shape_cast %60 : vector<2xf32> to vector<2x1xf32>
    %cst_45 = arith.constant 6.400000e+01 : f32
    %62 = vector.broadcast %cst_45 : f32 to vector<2x1xf32>
    %63 = arith.divf %61, %62 : vector<2x1xf32>
    %64 = vector.broadcast %63 : vector<2x1xf32> to vector<2x64xf32>
    %65 = arith.subf %59, %64 : vector<2x64xf32>
    %66 = arith.addf %58, %65 : vector<2x64xf32>
    %c2_46 = arith.constant 2 : index
    %c0_47 = arith.constant 0 : index
    %c0_48 = arith.constant 0 : index
    %67 = vector.load %arg4[%c2_46, %c0_47, %c0_48] : memref<8x2x64xf32, #tpu.memory_space<vmem>>, vector<1x2x64xf32>
    %68 = vector.shape_cast %67 : vector<1x2x64xf32> to vector<2x64xf32>
    %69 = vector.shape_cast %66 : vector<2x64xf32> to vector<1x2x64xf32>
    tpu.vector_store %arg4[%c2_46, %c0_47, %c0_48], %69 {strides = array<i32>} : memref<8x2x64xf32, #tpu.memory_space<vmem>>, vector<1x2x64xf32>,
    %c3 = arith.constant 3 : index
    %c0_49 = arith.constant 0 : index
    %c0_50 = arith.constant 0 : index
    %70 = vector.load %arg1[%c3, %c0_49, %c0_50] : memref<8x64x64xf32, #tpu.memory_space<vmem>>, vector<1x64x64xf32>
    %71 = vector.shape_cast %70 : vector<1x64x64xf32> to vector<64x64xf32>
    %72 = arith.addf %71, %0 : vector<64x64xf32>
    %cst_51 = arith.constant -1.000000e+00 : f32
    %cst_52 = arith.constant 1.000000e+00 : f32
    %73 = vector.broadcast %cst_51 : f32 to vector<64x64xf32>
    %74 = arith.maximumf %73, %72 : vector<64x64xf32>
    %75 = vector.broadcast %cst_52 : f32 to vector<64x64xf32>
    %76 = arith.minimumf %75, %74 : vector<64x64xf32>
    %c3_53 = arith.constant 3 : index
    %c0_54 = arith.constant 0 : index
    %c0_55 = arith.constant 0 : index
    %77 = vector.load %arg3[%c3_53, %c0_54, %c0_55] : memref<8x64x64xf32, #tpu.memory_space<vmem>>, vector<1x64x64xf32>
    %78 = vector.shape_cast %77 : vector<1x64x64xf32> to vector<64x64xf32>
    %79 = vector.shape_cast %76 : vector<64x64xf32> to vector<1x64x64xf32>
    tpu.vector_store %arg3[%c3_53, %c0_54, %c0_55], %79 {strides = array<i32>} : memref<8x64x64xf32, #tpu.memory_space<vmem>>, vector<1x64x64xf32>,
    %c3_56 = arith.constant 3 : index
    %c0_57 = arith.constant 0 : index
    %c0_58 = arith.constant 0 : index
    %80 = vector.load %arg0[%c3_56, %c0_57, %c0_58] : memref<8x2x64xf32, #tpu.memory_space<vmem>>, vector<1x2x64xf32>
    %81 = vector.shape_cast %80 : vector<1x2x64xf32> to vector<2x64xf32>
    %cst_59 = arith.constant dense<0.000000e+00> : vector<2x64xf32>
    %82 = tpu.matmul %81, %76, %cst_59 {dimension_numbers = #tpu.dot_dimension_numbers<[1], [0], [0], [1], [0, 0, 1, 1], [], []>} : vector<2x64xf32>, vector<64x64xf32>, vector<2x64xf32> -> vector<2x64xf32>
    %cst_60 = arith.constant dense<0.000000e+00> : vector<2xf32>
    %83 = vector.multi_reduction <add>, %82, %cst_60 [1] : vector<2x64xf32> to vector<2xf32>
    %84 = vector.shape_cast %83 : vector<2xf32> to vector<2x1xf32>
    %cst_61 = arith.constant 6.400000e+01 : f32
    %85 = vector.broadcast %cst_61 : f32 to vector<2x1xf32>
    %86 = arith.divf %84, %85 : vector<2x1xf32>
    %87 = vector.broadcast %86 : vector<2x1xf32> to vector<2x64xf32>
    %88 = arith.subf %82, %87 : vector<2x64xf32>
    %89 = arith.addf %81, %88 : vector<2x64xf32>
    %c3_62 = arith.constant 3 : index
    %c0_63 = arith.constant 0 : index
    %c0_64 = arith.constant 0 : index
    %90 = vector.load %arg4[%c3_62, %c0_63, %c0_64] : memref<8x2x64xf32, #tpu.memory_space<vmem>>, vector<1x2x64xf32>
    %91 = vector.shape_cast %90 : vector<1x2x64xf32> to vector<2x64xf32>
    %92 = vector.shape_cast %89 : vector<2x64xf32> to vector<1x2x64xf32>
    tpu.vector_store %arg4[%c3_62, %c0_63, %c0_64], %92 {strides = array<i32>} : memref<8x2x64xf32, #tpu.memory_space<vmem>>, vector<1x2x64xf32>,
    %c4 = arith.constant 4 : index
    %c0_65 = arith.constant 0 : index
    %c0_66 = arith.constant 0 : index
    %93 = vector.load %arg1[%c4, %c0_65, %c0_66] : memref<8x64x64xf32, #tpu.memory_space<vmem>>, vector<1x64x64xf32>
    %94 = vector.shape_cast %93 : vector<1x64x64xf32> to vector<64x64xf32>
    %95 = arith.addf %94, %0 : vector<64x64xf32>
    %cst_67 = arith.constant -1.000000e+00 : f32
    %cst_68 = arith.constant 1.000000e+00 : f32
    %96 = vector.broadcast %cst_67 : f32 to vector<64x64xf32>
    %97 = arith.maximumf %96, %95 : vector<64x64xf32>
    %98 = vector.broadcast %cst_68 : f32 to vector<64x64xf32>
    %99 = arith.minimumf %98, %97 : vector<64x64xf32>
    %c4_69 = arith.constant 4 : index
    %c0_70 = arith.constant 0 : index
    %c0_71 = arith.constant 0 : index
    %100 = vector.load %arg3[%c4_69, %c0_70, %c0_71] : memref<8x64x64xf32, #tpu.memory_space<vmem>>, vector<1x64x64xf32>
    %101 = vector.shape_cast %100 : vector<1x64x64xf32> to vector<64x64xf32>
    %102 = vector.shape_cast %99 : vector<64x64xf32> to vector<1x64x64xf32>
    tpu.vector_store %arg3[%c4_69, %c0_70, %c0_71], %102 {strides = array<i32>} : memref<8x64x64xf32, #tpu.memory_space<vmem>>, vector<1x64x64xf32>,
    %c4_72 = arith.constant 4 : index
    %c0_73 = arith.constant 0 : index
    %c0_74 = arith.constant 0 : index
    %103 = vector.load %arg0[%c4_72, %c0_73, %c0_74] : memref<8x2x64xf32, #tpu.memory_space<vmem>>, vector<1x2x64xf32>
    %104 = vector.shape_cast %103 : vector<1x2x64xf32> to vector<2x64xf32>
    %cst_75 = arith.constant dense<0.000000e+00> : vector<2x64xf32>
    %105 = tpu.matmul %104, %99, %cst_75 {dimension_numbers = #tpu.dot_dimension_numbers<[1], [0], [0], [1], [0, 0, 1, 1], [], []>} : vector<2x64xf32>, vector<64x64xf32>, vector<2x64xf32> -> vector<2x64xf32>
    %cst_76 = arith.constant dense<0.000000e+00> : vector<2xf32>
    %106 = vector.multi_reduction <add>, %105, %cst_76 [1] : vector<2x64xf32> to vector<2xf32>
    %107 = vector.shape_cast %106 : vector<2xf32> to vector<2x1xf32>
    %cst_77 = arith.constant 6.400000e+01 : f32
    %108 = vector.broadcast %cst_77 : f32 to vector<2x1xf32>
    %109 = arith.divf %107, %108 : vector<2x1xf32>
    %110 = vector.broadcast %109 : vector<2x1xf32> to vector<2x64xf32>
    %111 = arith.subf %105, %110 : vector<2x64xf32>
    %112 = arith.addf %104, %111 : vector<2x64xf32>
    %c4_78 = arith.constant 4 : index
    %c0_79 = arith.constant 0 : index
    %c0_80 = arith.constant 0 : index
    %113 = vector.load %arg4[%c4_78, %c0_79, %c0_80] : memref<8x2x64xf32, #tpu.memory_space<vmem>>, vector<1x2x64xf32>
    %114 = vector.shape_cast %113 : vector<1x2x64xf32> to vector<2x64xf32>
    %115 = vector.shape_cast %112 : vector<2x64xf32> to vector<1x2x64xf32>
    tpu.vector_store %arg4[%c4_78, %c0_79, %c0_80], %115 {strides = array<i32>} : memref<8x2x64xf32, #tpu.memory_space<vmem>>, vector<1x2x64xf32>,
    %c5 = arith.constant 5 : index
    %c0_81 = arith.constant 0 : index
    %c0_82 = arith.constant 0 : index
    %116 = vector.load %arg1[%c5, %c0_81, %c0_82] : memref<8x64x64xf32, #tpu.memory_space<vmem>>, vector<1x64x64xf32>
    %117 = vector.shape_cast %116 : vector<1x64x64xf32> to vector<64x64xf32>
    %118 = arith.addf %117, %0 : vector<64x64xf32>
    %cst_83 = arith.constant -1.000000e+00 : f32
    %cst_84 = arith.constant 1.000000e+00 : f32
    %119 = vector.broadcast %cst_83 : f32 to vector<64x64xf32>
    %120 = arith.maximumf %119, %118 : vector<64x64xf32>
    %121 = vector.broadcast %cst_84 : f32 to vector<64x64xf32>
    %122 = arith.minimumf %121, %120 : vector<64x64xf32>
    %c5_85 = arith.constant 5 : index
    %c0_86 = arith.constant 0 : index
    %c0_87 = arith.constant 0 : index
    %123 = vector.load %arg3[%c5_85, %c0_86, %c0_87] : memref<8x64x64xf32, #tpu.memory_space<vmem>>, vector<1x64x64xf32>
    %124 = vector.shape_cast %123 : vector<1x64x64xf32> to vector<64x64xf32>
    %125 = vector.shape_cast %122 : vector<64x64xf32> to vector<1x64x64xf32>
    tpu.vector_store %arg3[%c5_85, %c0_86, %c0_87], %125 {strides = array<i32>} : memref<8x64x64xf32, #tpu.memory_space<vmem>>, vector<1x64x64xf32>,
    %c5_88 = arith.constant 5 : index
    %c0_89 = arith.constant 0 : index
    %c0_90 = arith.constant 0 : index
    %126 = vector.load %arg0[%c5_88, %c0_89, %c0_90] : memref<8x2x64xf32, #tpu.memory_space<vmem>>, vector<1x2x64xf32>
    %127 = vector.shape_cast %126 : vector<1x2x64xf32> to vector<2x64xf32>
    %cst_91 = arith.constant dense<0.000000e+00> : vector<2x64xf32>
    %128 = tpu.matmul %127, %122, %cst_91 {dimension_numbers = #tpu.dot_dimension_numbers<[1], [0], [0], [1], [0, 0, 1, 1], [], []>} : vector<2x64xf32>, vector<64x64xf32>, vector<2x64xf32> -> vector<2x64xf32>
    %cst_92 = arith.constant dense<0.000000e+00> : vector<2xf32>
    %129 = vector.multi_reduction <add>, %128, %cst_92 [1] : vector<2x64xf32> to vector<2xf32>
    %130 = vector.shape_cast %129 : vector<2xf32> to vector<2x1xf32>
    %cst_93 = arith.constant 6.400000e+01 : f32
    %131 = vector.broadcast %cst_93 : f32 to vector<2x1xf32>
    %132 = arith.divf %130, %131 : vector<2x1xf32>
    %133 = vector.broadcast %132 : vector<2x1xf32> to vector<2x64xf32>
    %134 = arith.subf %128, %133 : vector<2x64xf32>
    %135 = arith.addf %127, %134 : vector<2x64xf32>
    %c5_94 = arith.constant 5 : index
    %c0_95 = arith.constant 0 : index
    %c0_96 = arith.constant 0 : index
    %136 = vector.load %arg4[%c5_94, %c0_95, %c0_96] : memref<8x2x64xf32, #tpu.memory_space<vmem>>, vector<1x2x64xf32>
    %137 = vector.shape_cast %136 : vector<1x2x64xf32> to vector<2x64xf32>
    %138 = vector.shape_cast %135 : vector<2x64xf32> to vector<1x2x64xf32>
    tpu.vector_store %arg4[%c5_94, %c0_95, %c0_96], %138 {strides = array<i32>} : memref<8x2x64xf32, #tpu.memory_space<vmem>>, vector<1x2x64xf32>,
    %c6 = arith.constant 6 : index
    %c0_97 = arith.constant 0 : index
    %c0_98 = arith.constant 0 : index
    %139 = vector.load %arg1[%c6, %c0_97, %c0_98] : memref<8x64x64xf32, #tpu.memory_space<vmem>>, vector<1x64x64xf32>
    %140 = vector.shape_cast %139 : vector<1x64x64xf32> to vector<64x64xf32>
    %141 = arith.addf %140, %0 : vector<64x64xf32>
    %cst_99 = arith.constant -1.000000e+00 : f32
    %cst_100 = arith.constant 1.000000e+00 : f32
    %142 = vector.broadcast %cst_99 : f32 to vector<64x64xf32>
    %143 = arith.maximumf %142, %141 : vector<64x64xf32>
    %144 = vector.broadcast %cst_100 : f32 to vector<64x64xf32>
    %145 = arith.minimumf %144, %143 : vector<64x64xf32>
    %c6_101 = arith.constant 6 : index
    %c0_102 = arith.constant 0 : index
    %c0_103 = arith.constant 0 : index
    %146 = vector.load %arg3[%c6_101, %c0_102, %c0_103] : memref<8x64x64xf32, #tpu.memory_space<vmem>>, vector<1x64x64xf32>
    %147 = vector.shape_cast %146 : vector<1x64x64xf32> to vector<64x64xf32>
    %148 = vector.shape_cast %145 : vector<64x64xf32> to vector<1x64x64xf32>
    tpu.vector_store %arg3[%c6_101, %c0_102, %c0_103], %148 {strides = array<i32>} : memref<8x64x64xf32, #tpu.memory_space<vmem>>, vector<1x64x64xf32>,
    %c6_104 = arith.constant 6 : index
    %c0_105 = arith.constant 0 : index
    %c0_106 = arith.constant 0 : index
    %149 = vector.load %arg0[%c6_104, %c0_105, %c0_106] : memref<8x2x64xf32, #tpu.memory_space<vmem>>, vector<1x2x64xf32>
    %150 = vector.shape_cast %149 : vector<1x2x64xf32> to vector<2x64xf32>
    %cst_107 = arith.constant dense<0.000000e+00> : vector<2x64xf32>
    %151 = tpu.matmul %150, %145, %cst_107 {dimension_numbers = #tpu.dot_dimension_numbers<[1], [0], [0], [1], [0, 0, 1, 1], [], []>} : vector<2x64xf32>, vector<64x64xf32>, vector<2x64xf32> -> vector<2x64xf32>
    %cst_108 = arith.constant dense<0.000000e+00> : vector<2xf32>
    %152 = vector.multi_reduction <add>, %151, %cst_108 [1] : vector<2x64xf32> to vector<2xf32>
    %153 = vector.shape_cast %152 : vector<2xf32> to vector<2x1xf32>
    %cst_109 = arith.constant 6.400000e+01 : f32
    %154 = vector.broadcast %cst_109 : f32 to vector<2x1xf32>
    %155 = arith.divf %153, %154 : vector<2x1xf32>
    %156 = vector.broadcast %155 : vector<2x1xf32> to vector<2x64xf32>
    %157 = arith.subf %151, %156 : vector<2x64xf32>
    %158 = arith.addf %150, %157 : vector<2x64xf32>
    %c6_110 = arith.constant 6 : index
    %c0_111 = arith.constant 0 : index
    %c0_112 = arith.constant 0 : index
    %159 = vector.load %arg4[%c6_110, %c0_111, %c0_112] : memref<8x2x64xf32, #tpu.memory_space<vmem>>, vector<1x2x64xf32>
    %160 = vector.shape_cast %159 : vector<1x2x64xf32> to vector<2x64xf32>
    %161 = vector.shape_cast %158 : vector<2x64xf32> to vector<1x2x64xf32>
    tpu.vector_store %arg4[%c6_110, %c0_111, %c0_112], %161 {strides = array<i32>} : memref<8x2x64xf32, #tpu.memory_space<vmem>>, vector<1x2x64xf32>,
    %c7 = arith.constant 7 : index
    %c0_113 = arith.constant 0 : index
    %c0_114 = arith.constant 0 : index
    %162 = vector.load %arg1[%c7, %c0_113, %c0_114] : memref<8x64x64xf32, #tpu.memory_space<vmem>>, vector<1x64x64xf32>
    %163 = vector.shape_cast %162 : vector<1x64x64xf32> to vector<64x64xf32>
    %164 = arith.addf %163, %0 : vector<64x64xf32>
    %cst_115 = arith.constant -1.000000e+00 : f32
    %cst_116 = arith.constant 1.000000e+00 : f32
    %165 = vector.broadcast %cst_115 : f32 to vector<64x64xf32>
    %166 = arith.maximumf %165, %164 : vector<64x64xf32>
    %167 = vector.broadcast %cst_116 : f32 to vector<64x64xf32>
    %168 = arith.minimumf %167, %166 : vector<64x64xf32>
    %c7_117 = arith.constant 7 : index
    %c0_118 = arith.constant 0 : index
    %c0_119 = arith.constant 0 : index
    %169 = vector.load %arg3[%c7_117, %c0_118, %c0_119] : memref<8x64x64xf32, #tpu.memory_space<vmem>>, vector<1x64x64xf32>
    %170 = vector.shape_cast %169 : vector<1x64x64xf32> to vector<64x64xf32>
    %171 = vector.shape_cast %168 : vector<64x64xf32> to vector<1x64x64xf32>
    tpu.vector_store %arg3[%c7_117, %c0_118, %c0_119], %171 {strides = array<i32>} : memref<8x64x64xf32, #tpu.memory_space<vmem>>, vector<1x64x64xf32>,
    %c7_120 = arith.constant 7 : index
    %c0_121 = arith.constant 0 : index
    %c0_122 = arith.constant 0 : index
    %172 = vector.load %arg0[%c7_120, %c0_121, %c0_122] : memref<8x2x64xf32, #tpu.memory_space<vmem>>, vector<1x2x64xf32>
    %173 = vector.shape_cast %172 : vector<1x2x64xf32> to vector<2x64xf32>
    %cst_123 = arith.constant dense<0.000000e+00> : vector<2x64xf32>
    %174 = tpu.matmul %173, %168, %cst_123 {dimension_numbers = #tpu.dot_dimension_numbers<[1], [0], [0], [1], [0, 0, 1, 1], [], []>} : vector<2x64xf32>, vector<64x64xf32>, vector<2x64xf32> -> vector<2x64xf32>
    %cst_124 = arith.constant dense<0.000000e+00> : vector<2xf32>
    %175 = vector.multi_reduction <add>, %174, %cst_124 [1] : vector<2x64xf32> to vector<2xf32>
    %176 = vector.shape_cast %175 : vector<2xf32> to vector<2x1xf32>
    %cst_125 = arith.constant 6.400000e+01 : f32
    %177 = vector.broadcast %cst_125 : f32 to vector<2x1xf32>
    %178 = arith.divf %176, %177 : vector<2x1xf32>
    %179 = vector.broadcast %178 : vector<2x1xf32> to vector<2x64xf32>
    %180 = arith.subf %174, %179 : vector<2x64xf32>
    %181 = arith.addf %173, %180 : vector<2x64xf32>
    %c7_126 = arith.constant 7 : index
    %c0_127 = arith.constant 0 : index
    %c0_128 = arith.constant 0 : index
    %182 = vector.load %arg4[%c7_126, %c0_127, %c0_128] : memref<8x2x64xf32, #tpu.memory_space<vmem>>, vector<1x2x64xf32>
    %183 = vector.shape_cast %182 : vector<1x2x64xf32> to vector<2x64xf32>
    %184 = vector.shape_cast %181 : vector<2x64xf32> to vector<1x2x64xf32>
    tpu.vector_store %arg4[%c7_126, %c0_127, %c0_128], %184 {strides = array<i32>} : memref<8x2x64xf32, #tpu.memory_space<vmem>>, vector<1x2x64xf32>,
    return
  }
}

</mosaic_0001>

<llo_original>
// kernel: hebbian_encoder_forward.2
$region0: #{hebbian_encoder_forward.2}
  #allocation0 [shape = 'u32[]', space=smem, size = 0x4, offset = 0x4, fixed_abs, tag = 'smem constant byte address 0x4 - core index']
  #allocation1 [shape = 'u32[144,128]{1,0:T(1,128)}', space=vmem, size = 0x12000, scoped, tag = 'internal scratch']
  %s0 = inlined_call_operand.vmem [shape: f32[36,128], index: 0, kind: input, shape index: {}]
  %s1 = inlined_call_operand.vmem [shape: f32[8,36], index: 1, kind: input, shape index: {}]
  %s2 = inlined_call_operand.vmem [shape: f32[8,1], index: 2, kind: input, shape index: {}]
  %s3 = inlined_call_operand.vmem [shape: f32[8,128], index: 3, kind: output, shape index: {0}]
  %s4 = inlined_call_operand.vmem [shape: f32[64,64], index: 4, kind: output, shape index: {1}]
  %5 = xla_tuple %s3, %s4
  %s6 = sld [smem:[#allocation0]]
  $region30: #{hebbian_encoder_forward.2} parent=0
    _
  %s8 = ssub.s32 1, %s6
  %s9 = scalar_select 0, %s8, %s6
  // Predicated region
  $region2: #{hebbian_encoder_forward.2} parent=0 // pred_check
    _
  $region3: #{hebbian_encoder_forward.2} parent=0 // pred_check_branch
    %11 = sbr.rel (0) target = $region5
  $region4: #{hebbian_encoder_forward.2} parent=0 // pred_region
    _
  $region5: #{hebbian_encoder_forward.2} parent=0 // pred_fallthru
    _
  // Predicated region
  $region6: #{hebbian_encoder_forward.2} parent=0 // pred_check
    _
  $region7: #{hebbian_encoder_forward.2} parent=0 // pred_check_branch
    %13 = sbr.rel (0) target = $region9
  $region8: #{hebbian_encoder_forward.2} parent=0 // pred_region
    _
  $region9: #{hebbian_encoder_forward.2} parent=0 // pred_fallthru
    _
  // Predicated region
  $region10: #{hebbian_encoder_forward.2} parent=0 // pred_check
    _
  $region11: #{hebbian_encoder_forward.2} parent=0 // pred_check_branch
    %15 = sbr.rel (0) target = $region13
  $region12: #{hebbian_encoder_forward.2} parent=0 // pred_region
    _
  $region13: #{hebbian_encoder_forward.2} parent=0 // pred_fallthru
    _
  %v16 = vld [vmem:[%s1] sm:$0xff]
  %v17 = vld [vmem:[%s0] sm:$0xff]
  %v18 = vld [vmem:[%s0 + $0x8] sm:$0xff]
  %v19 = vld [vmem:[%s0 + $0x10] sm:$0xff]
  %v20 = vld [vmem:[%s0 + $0x18] sm:$0xff]
  %v21 = vld [vmem:[%s0 + $0x20] sm:$0xf]
  %v22 = vld [vmem:[%s2] sm:$0xff]
  %24 = vset.pattern.permute.xlu0 0
  %25 = vperm.xlu0 %24, %v22
  %v26 = vpop.permute.xlu0 %25
  %vm28 = vcmask 293888
  %v30 = vsel %vm28, %v16, 0
  %vm32 = vcmask 1043456
  %v34 = vsel %vm32, %v21, 0
  %36 = vmatprep.subr.mxu0 0.0
  %37 = vmatpush1.msra.mxu0 %v17
  %38 = vmatprep.subr.mxu0 0.0
  %39 = vmatpush1.msra.mxu0 %v18
  %40 = vmatprep.subr.mxu0 0.0
  %41 = vmatpush1.msra.mxu0 %v19
  %42 = vmatprep.subr.mxu0 0.0
  %43 = vmatpush1.msra.mxu0 %v20
  %44 = vmatprep.subr.mxu0 0.0
  %45 = vmatpush1.msra.mxu0 %v34
  %46 = vmatprep.subr.mxu0 0.0
  %47 = vmatpush1.msra.mxu0 0.0
  %48 = vmatprep.subr.mxu0 0.0
  %49 = vmatpush1.msra.mxu0 0.0
  %50 = vmatprep.subr.mxu0 0.0
  %51 = vmatpush1.msra.mxu0 0.0
  %52 = vmatprep.subr.mxu0 0.0
  %53 = vmatpush1.msra.mxu0 0.0
  %54 = vmatprep.subr.mxu0 0.0
  %55 = vmatpush1.msra.mxu0 0.0
  %56 = vmatprep.subr.mxu0 0.0
  %57 = vmatpush1.msra.mxu0 0.0
  %58 = vmatprep.subr.mxu0 0.0
  %59 = vmatpush1.msra.mxu0 0.0
  %60 = vmatprep.subr.mxu0 0.0
  %61 = vmatpush1.msra.mxu0 0.0
  %62 = vmatprep.subr.mxu0 0.0
  %63 = vmatpush1.msra.mxu0 0.0
  %64 = vmatprep.subr.mxu0 0.0
  %65 = vmatpush1.msra.mxu0 0.0
  %66 = vmatprep.subr.mxu0 0.0
  %67 = vmatpush1.msra.mxu0 0.0
  %68 = vmatprep.subr.mxu0 0.0
  %69 = vmatpush1.msra.mxu0 0.0
  %70 = vmatprep.subr.mxu0 0.0
  %71 = vmatpush1.msra.mxu0 0.0
  %72 = vmatprep.subr.mxu0 0.0
  %73 = vmatpush1.msra.mxu0 0.0
  %74 = vmatprep.subr.mxu0 0.0
  %75 = vmatpush1.msra.mxu0 0.0
  %76 = vmatprep.subr.mxu0 0.0
  %77 = vmatpush1.msra.mxu0 0.0
  %78 = vmatprep.subr.mxu0 0.0
  %79 = vmatpush1.msra.mxu0 0.0
  %80 = vmatprep.subr.mxu0 0.0
  %81 = vmatpush1.msra.mxu0 0.0
  %82 = vmatprep.subr.mxu0 0.0
  %83 = vmatpush1.msra.mxu0 0.0
  %84 = vmatprep.subr.mxu0 0.0
  %85 = vmatpush1.msra.mxu0 0.0
  %86 = vmatprep.subr.mxu0 0.0
  %87 = vmatpush1.msra.mxu0 0.0
  %88 = vmatprep.subr.mxu0 0.0
  %89 = vmatpush1.msra.mxu0 0.0
  %90 = vmatprep.subr.mxu0 0.0
  %91 = vmatpush1.msra.mxu0 0.0
  %92 = vmatprep.subr.mxu0 0.0
  %93 = vmatpush1.msra.mxu0 0.0
  %94 = vmatprep.subr.mxu0 0.0
  %95 = vmatpush1.msra.mxu0 0.0
  %96 = vmatprep.subr.mxu0 0.0
  %97 = vmatpush1.msra.mxu0 0.0
  %98 = vmatprep.subr.mxu0 0.0
  %99 = vmatpush1.msra.mxu0 0.0
  %100 = vmatprep.mubr.f32.mxu0 0.0
  %101 = vmatmul.mubr.f32.gmra.mrb[0].mxu0 %v30
  %v102 = vpop.f32.mrb[0].mxu0
  %v103 = vadd.f32 %v26, %v102
  %v104 = vpop.f32.mrb[0].mxu0
  %105 = vdwg.mxu0
  %v106 = vmax.f32 %v103, 0.0
  %v107 = vmul.f32 %v106, %v106
  %vm108 = vcmask 523264
  %v109 = vsel %vm108, %v107, 0.0
  %110 = vadd.xlane.f32.xlu0 %v109
  %v111 = vpop.xlane.xlu0 %110
  %v112 = vrsqrt.pop %v111
  %v113 = vmul.f32 %v111, %v112
  %vm114 = vcmp.eq.f32.partialorder %v111, inf
  %v115 = vsel %vm114, %v111, %v113
  %vm116 = vcmp.eq.f32.partialorder %v111, 0.0
  %v117 = vand.u32 %v111, 2147483648
  %v118 = vsel %vm116, %v117, %v115
  %v119 = vadd.f32 %v118, 1e-06
  %v120 = vrcp.pop %v119
  %v121 = vmul.f32 %v106, %v120
  %123 = vrot.lane.b32.xlu0 %v107, 64
  %v124 = vpop.permute.xlu0 %123
  %v126 = vsel %vm108, %v124, 0.0
  %127 = vadd.xlane.f32.xlu0 %v126
  %v128 = vpop.xlane.xlu0 %127
  %v129 = vrsqrt.pop %v128
  %v130 = vmul.f32 %v128, %v129
  %vm131 = vcmp.eq.f32.partialorder %v128, inf
  %v132 = vsel %vm131, %v128, %v130
  %vm133 = vcmp.eq.f32.partialorder %v128, 0.0
  %v134 = vand.u32 %v128, 2147483648
  %v135 = vsel %vm133, %v134, %v132
  %v136 = vadd.f32 %v135, 1e-06
  %v137 = vrcp.pop %v136
  %v138 = vmul.f32 %v106, %v137
  %140 = vrot.lane.b32.xlu0 %v138, 64
  %v141 = vpop.permute.xlu0 %140
  %143 = vxpose.xlu0.b32.start [1/16] %v141, 128
  %144 = vxpose.xlu0.b32.cont [2/16] 0.0, 128
  %145 = vxpose.xlu0.b32.cont [3/16] 0.0, 128
  %146 = vxpose.xlu0.b32.cont [4/16] 0.0, 128
  %147 = vxpose.xlu0.b32.cont [5/16] 0.0, 128
  %148 = vxpose.xlu0.b32.cont [6/16] 0.0, 128
  %149 = vxpose.xlu0.b32.cont [7/16] 0.0, 128
  %150 = vxpose.xlu0.b32.cont [8/16] 0.0, 128
  %151 = vxpose.xlu0.b32.cont [9/16] 0.0, 128
  %152 = vxpose.xlu0.b32.cont [10/16] 0.0, 128
  %153 = vxpose.xlu0.b32.cont [11/16] 0.0, 128
  %154 = vxpose.xlu0.b32.cont [12/16] 0.0, 128
  %155 = vxpose.xlu0.b32.cont [13/16] 0.0, 128
  %156 = vxpose.xlu0.b32.cont [14/16] 0.0, 128
  %157 = vxpose.xlu0.b32.cont [15/16] 0.0, 128
  %158 = vxpose.xlu0.b32.end [16/16] 0.0, 128
  %v159 = vpop.trf.xlu0
  %v160 = vpop.trf.xlu0
  %v161 = vpop.trf.xlu0
  %v162 = vpop.trf.xlu0
  %v163 = vpop.trf.xlu0
  %v164 = vpop.trf.xlu0
  %v165 = vpop.trf.xlu0
  %v166 = vpop.trf.xlu0
  %v167 = vpop.trf.xlu0
  %v168 = vpop.trf.xlu0
  %v169 = vpop.trf.xlu0
  %v170 = vpop.trf.xlu0
  %v171 = vpop.trf.xlu0
  %v172 = vpop.trf.xlu0
  %v173 = vpop.trf.xlu0
  %v174 = vpop.trf.xlu0
  %vm175 = vcmask 64512
  %v177 = vsel %vm175, %v159, 0
  %v180 = vsel %vm175, %v160, 0
  %v183 = vsel %vm175, %v161, 0
  %v186 = vsel %vm175, %v162, 0
  %v189 = vsel %vm175, %v163, 0
  %v192 = vsel %vm175, %v164, 0
  %v195 = vsel %vm175, %v165, 0
  %v198 = vsel %vm175, %v166, 0
  %200 = vmatprep.subr.mxu0 0.0
  %201 = vmatpush1.msra.mxu0 %v141
  %202 = vmatprep.subr.mxu0 0.0
  %203 = vmatpush1.msra.mxu0 0.0
  %204 = vmatprep.subr.mxu0 0.0
  %205 = vmatpush1.msra.mxu0 0.0
  %206 = vmatprep.subr.mxu0 0.0
  %207 = vmatpush1.msra.mxu0 0.0
  %208 = vmatprep.subr.mxu0 0.0
  %209 = vmatpush1.msra.mxu0 0.0
  %210 = vmatprep.subr.mxu0 0.0
  %211 = vmatpush1.msra.mxu0 0.0
  %212 = vmatprep.subr.mxu0 0.0
  %213 = vmatpush1.msra.mxu0 0.0
  %214 = vmatprep.subr.mxu0 0.0
  %215 = vmatpush1.msra.mxu0 0.0
  %216 = vmatprep.subr.mxu0 0.0
  %217 = vmatpush1.msra.mxu0 0.0
  %218 = vmatprep.subr.mxu0 0.0
  %219 = vmatpush1.msra.mxu0 0.0
  %220 = vmatprep.subr.mxu0 0.0
  %221 = vmatpush1.msra.mxu0 0.0
  %222 = vmatprep.subr.mxu0 0.0
  %223 = vmatpush1.msra.mxu0 0.0
  %224 = vmatprep.subr.mxu0 0.0
  %225 = vmatpush1.msra.mxu0 0.0
  %226 = vmatprep.subr.mxu0 0.0
  %227 = vmatpush1.msra.mxu0 0.0
  %228 = vmatprep.subr.mxu0 0.0
  %229 = vmatpush1.msra.mxu0 0.0
  %230 = vmatprep.subr.mxu0 0.0
  %231 = vmatpush1.msra.mxu0 0.0
  %232 = vmatprep.subr.mxu0 0.0
  %233 = vmatpush1.msra.mxu0 0.0
  %234 = vmatprep.subr.mxu0 0.0
  %235 = vmatpush1.msra.mxu0 0.0
  %236 = vmatprep.subr.mxu0 0.0
  %237 = vmatpush1.msra.mxu0 0.0
  %238 = vmatprep.subr.mxu0 0.0
  %239 = vmatpush1.msra.mxu0 0.0
  %240 = vmatprep.subr.mxu0 0.0
  %241 = vmatpush1.msra.mxu0 0.0
  %242 = vmatprep.subr.mxu0 0.0
  %243 = vmatpush1.msra.mxu0 0.0
  %244 = vmatprep.subr.mxu0 0.0
  %245 = vmatpush1.msra.mxu0 0.0
  %246 = vmatprep.subr.mxu0 0.0
  %247 = vmatpush1.msra.mxu0 0.0
  %248 = vmatprep.subr.mxu0 0.0
  %249 = vmatpush1.msra.mxu0 0.0
  %250 = vmatprep.subr.mxu0 0.0
  %251 = vmatpush1.msra.mxu0 0.0
  %252 = vmatprep.subr.mxu0 0.0
  %253 = vmatpush1.msra.mxu0 0.0
  %254 = vmatprep.subr.mxu0 0.0
  %255 = vmatpush1.msra.mxu0 0.0
  %256 = vmatprep.subr.mxu0 0.0
  %257 = vmatpush1.msra.mxu0 0.0
  %258 = vmatprep.subr.mxu0 0.0
  %259 = vmatpush1.msra.mxu0 0.0
  %260 = vmatprep.subr.mxu0 0.0
  %261 = vmatpush1.msra.mxu0 0.0
  %262 = vmatprep.subr.mxu0 0.0
  %263 = vmatpush1.msra.mxu0 0.0
  %264 = vmatprep.mubr.f32.mxu0 0.0
  %265 = vmatmul.mubr.f32.gmra.mrb[0].mxu0 %v177
  %v266 = vpop.f32.mrb[0].mxu0
  %v267 = vadd.f32 0.0, %v266
  %v268 = vpop.f32.mrb[0].mxu0
  %269 = vmatprep.mubr.f32.mxu0 0.0
  %270 = vmatmul.mubr.f32.gmra.mrb[0].mxu0 %v180
  %v271 = vpop.f32.mrb[0].mxu0
  %v272 = vadd.f32 0.0, %v271
  %v273 = vpop.f32.mrb[0].mxu0
  %274 = vmatprep.mubr.f32.mxu0 0.0
  %275 = vmatmul.mubr.f32.gmra.mrb[0].mxu0 %v183
  %v276 = vpop.f32.mrb[0].mxu0
  %v277 = vadd.f32 0.0, %v276
  %v278 = vpop.f32.mrb[0].mxu0
  %279 = vmatprep.mubr.f32.mxu0 0.0
  %280 = vmatmul.mubr.f32.gmra.mrb[0].mxu0 %v186
  %v281 = vpop.f32.mrb[0].mxu0
  %v282 = vadd.f32 0.0, %v281
  %v283 = vpop.f32.mrb[0].mxu0
  %284 = vmatprep.mubr.f32.mxu0 0.0
  %285 = vmatmul.mubr.f32.gmra.mrb[0].mxu0 %v189
  %v286 = vpop.f32.mrb[0].mxu0
  %v287 = vadd.f32 0.0, %v286
  %v288 = vpop.f32.mrb[0].mxu0
  %289 = vmatprep.mubr.f32.mxu0 0.0
  %290 = vmatmul.mubr.f32.gmra.mrb[0].mxu0 %v192
  %v291 = vpop.f32.mrb[0].mxu0
  %v292 = vadd.f32 0.0, %v291
  %v293 = vpop.f32.mrb[0].mxu0
  %294 = vmatprep.mubr.f32.mxu0 0.0
  %295 = vmatmul.mubr.f32.gmra.mrb[0].mxu0 %v195
  %v296 = vpop.f32.mrb[0].mxu0
  %v297 = vadd.f32 0.0, %v296
  %v298 = vpop.f32.mrb[0].mxu0
  %299 = vmatprep.mubr.f32.mxu0 0.0
  %300 = vmatmul.mubr.f32.gmra.mrb[0].mxu0 %v198
  %v301 = vpop.f32.mrb[0].mxu0
  %v302 = vadd.f32 0.0, %v301
  %v303 = vpop.f32.mrb[0].mxu0
  %304 = vdwg.mxu0
  %305 = vxpose.xlu0.b32.start [1/16] %v121, 128
  %306 = vxpose.xlu0.b32.cont [2/16] 0.0, 128
  %307 = vxpose.xlu0.b32.cont [3/16] 0.0, 128
  %308 = vxpose.xlu0.b32.cont [4/16] 0.0, 128
  %309 = vxpose.xlu0.b32.cont [5/16] 0.0, 128
  %310 = vxpose.xlu0.b32.cont [6/16] 0.0, 128
  %311 = vxpose.xlu0.b32.cont [7/16] 0.0, 128
  %312 = vxpose.xlu0.b32.cont [8/16] 0.0, 128
  %313 = vxpose.xlu0.b32.cont [9/16] 0.0, 128
  %314 = vxpose.xlu0.b32.cont [10/16] 0.0, 128
  %315 = vxpose.xlu0.b32.cont [11/16] 0.0, 128
  %316 = vxpose.xlu0.b32.cont [12/16] 0.0, 128
  %317 = vxpose.xlu0.b32.cont [13/16] 0.0, 128
  %318 = vxpose.xlu0.b32.cont [14/16] 0.0, 128
  %319 = vxpose.xlu0.b32.cont [15/16] 0.0, 128
  %320 = vxpose.xlu0.b32.end [16/16] 0.0, 128
  %v321 = vpop.trf.xlu0
  %v322 = vpop.trf.xlu0
  %v323 = vpop.trf.xlu0
  %v324 = vpop.trf.xlu0
  %v325 = vpop.trf.xlu0
  %v326 = vpop.trf.xlu0
  %v327 = vpop.trf.xlu0
  %v328 = vpop.trf.xlu0
  %v329 = vpop.trf.xlu0
  %v330 = vpop.trf.xlu0
  %v331 = vpop.trf.xlu0
  %v332 = vpop.trf.xlu0
  %v333 = vpop.trf.xlu0
  %v334 = vpop.trf.xlu0
  %v335 = vpop.trf.xlu0
  %v336 = vpop.trf.xlu0
  %v338 = vsel %vm175, %v321, 0
  %v341 = vsel %vm175, %v322, 0
  %v344 = vsel %vm175, %v323, 0
  %v347 = vsel %vm175, %v324, 0
  %v350 = vsel %vm175, %v325, 0
  %v353 = vsel %vm175, %v326, 0
  %v356 = vsel %vm175, %v327, 0
  %v359 = vsel %vm175, %v328, 0
  %361 = vmatprep.subr.mxu0 0.0
  %362 = vmatpush1.msra.mxu0 %v121
  %363 = vmatprep.subr.mxu0 0.0
  %364 = vmatpush1.msra.mxu0 0.0
  %365 = vmatprep.subr.mxu0 0.0
  %366 = vmatpush1.msra.mxu0 0.0
  %367 = vmatprep.subr.mxu0 0.0
  %368 = vmatpush1.msra.mxu0 0.0
  %369 = vmatprep.subr.mxu0 0.0
  %370 = vmatpush1.msra.mxu0 0.0
  %371 = vmatprep.subr.mxu0 0.0
  %372 = vmatpush1.msra.mxu0 0.0
  %373 = vmatprep.subr.mxu0 0.0
  %374 = vmatpush1.msra.mxu0 0.0
  %375 = vmatprep.subr.mxu0 0.0
  %376 = vmatpush1.msra.mxu0 0.0
  %377 = vmatprep.subr.mxu0 0.0
  %378 = vmatpush1.msra.mxu0 0.0
  %379 = vmatprep.subr.mxu0 0.0
  %380 = vmatpush1.msra.mxu0 0.0
  %381 = vmatprep.subr.mxu0 0.0
  %382 = vmatpush1.msra.mxu0 0.0
  %383 = vmatprep.subr.mxu0 0.0
  %384 = vmatpush1.msra.mxu0 0.0
  %385 = vmatprep.subr.mxu0 0.0
  %386 = vmatpush1.msra.mxu0 0.0
  %387 = vmatprep.subr.mxu0 0.0
  %388 = vmatpush1.msra.mxu0 0.0
  %389 = vmatprep.subr.mxu0 0.0
  %390 = vmatpush1.msra.mxu0 0.0
  %391 = vmatprep.subr.mxu0 0.0
  %392 = vmatpush1.msra.mxu0 0.0
  %393 = vmatprep.subr.mxu0 0.0
  %394 = vmatpush1.msra.mxu0 0.0
  %395 = vmatprep.subr.mxu0 0.0
  %396 = vmatpush1.msra.mxu0 0.0
  %397 = vmatprep.subr.mxu0 0.0
  %398 = vmatpush1.msra.mxu0 0.0
  %399 = vmatprep.subr.mxu0 0.0
  %400 = vmatpush1.msra.mxu0 0.0
  %401 = vmatprep.subr.mxu0 0.0
  %402 = vmatpush1.msra.mxu0 0.0
  %403 = vmatprep.subr.mxu0 0.0
  %404 = vmatpush1.msra.mxu0 0.0
  %405 = vmatprep.subr.mxu0 0.0
  %406 = vmatpush1.msra.mxu0 0.0
  %407 = vmatprep.subr.mxu0 0.0
  %408 = vmatpush1.msra.mxu0 0.0
  %409 = vmatprep.subr.mxu0 0.0
  %410 = vmatpush1.msra.mxu0 0.0
  %411 = vmatprep.subr.mxu0 0.0
  %412 = vmatpush1.msra.mxu0 0.0
  %413 = vmatprep.subr.mxu0 0.0
  %414 = vmatpush1.msra.mxu0 0.0
  %415 = vmatprep.subr.mxu0 0.0
  %416 = vmatpush1.msra.mxu0 0.0
  %417 = vmatprep.subr.mxu0 0.0
  %418 = vmatpush1.msra.mxu0 0.0
  %419 = vmatprep.subr.mxu0 0.0
  %420 = vmatpush1.msra.mxu0 0.0
  %421 = vmatprep.subr.mxu0 0.0
  %422 = vmatpush1.msra.mxu0 0.0
  %423 = vmatprep.subr.mxu0 0.0
  %424 = vmatpush1.msra.mxu0 0.0
  %425 = vmatprep.mubr.f32.mxu0 0.0
  %426 = vmatmul.mubr.f32.gmra.mrb[0].mxu0 %v338
  %v427 = vpop.f32.mrb[0].mxu0
  %v428 = vadd.f32 %v267, %v427
  %v429 = vpop.f32.mrb[0].mxu0
  %430 = vmatprep.mubr.f32.mxu0 0.0
  %431 = vmatmul.mubr.f32.gmra.mrb[0].mxu0 %v341
  %v432 = vpop.f32.mrb[0].mxu0
  %v433 = vadd.f32 %v272, %v432
  %v434 = vpop.f32.mrb[0].mxu0
  %435 = vmatprep.mubr.f32.mxu0 0.0
  %436 = vmatmul.mubr.f32.gmra.mrb[0].mxu0 %v344
  %v437 = vpop.f32.mrb[0].mxu0
  %v438 = vadd.f32 %v277, %v437
  %v439 = vpop.f32.mrb[0].mxu0
  %440 = vmatprep.mubr.f32.mxu0 0.0
  %441 = vmatmul.mubr.f32.gmra.mrb[0].mxu0 %v347
  %v442 = vpop.f32.mrb[0].mxu0
  %v443 = vadd.f32 %v282, %v442
  %v444 = vpop.f32.mrb[0].mxu0
  %445 = vmatprep.mubr.f32.mxu0 0.0
  %446 = vmatmul.mubr.f32.gmra.mrb[0].mxu0 %v350
  %v447 = vpop.f32.mrb[0].mxu0
  %v448 = vadd.f32 %v287, %v447
  %v449 = vpop.f32.mrb[0].mxu0
  %450 = vmatprep.mubr.f32.mxu0 0.0
  %451 = vmatmul.mubr.f32.gmra.mrb[0].mxu0 %v353
  %v452 = vpop.f32.mrb[0].mxu0
  %v453 = vadd.f32 %v292, %v452
  %v454 = vpop.f32.mrb[0].mxu0
  %455 = vmatprep.mubr.f32.mxu0 0.0
  %456 = vmatmul.mubr.f32.gmra.mrb[0].mxu0 %v356
  %v457 = vpop.f32.mrb[0].mxu0
  %v458 = vadd.f32 %v297, %v457
  %v459 = vpop.f32.mrb[0].mxu0
  %460 = vmatprep.mubr.f32.mxu0 0.0
  %461 = vmatmul.mubr.f32.gmra.mrb[0].mxu0 %v359
  %v462 = vpop.f32.mrb[0].mxu0
  %v463 = vadd.f32 %v302, %v462
  %v464 = vpop.f32.mrb[0].mxu0
  %465 = vdwg.mxu0
  %v466 = vsel %vm108, %v121, %v138
  %467 = vst [vmem:[%s3] sm:$0xff] %v466
  %v468 = vmul.f32 %v428, 0.000125
  %v469 = vmul.f32 %v433, 0.000125
  %v470 = vmul.f32 %v438, 0.000125
  %v471 = vmul.f32 %v443, 0.000125
  %v472 = vmul.f32 %v448, 0.000125
  %v473 = vmul.f32 %v453, 0.000125
  %v474 = vmul.f32 %v458, 0.000125
  %v475 = vmul.f32 %v463, 0.000125
  %476 = vst.msk [vmem:[%s4] sm:$0xff] %vm108, %v468
  %477 = vst.msk [vmem:[%s4 + $0x8] sm:$0xff] %vm108, %v469
  %478 = vst.msk [vmem:[%s4 + $0x10] sm:$0xff] %vm108, %v470
  %479 = vst.msk [vmem:[%s4 + $0x18] sm:$0xff] %vm108, %v471
  %480 = vst.msk [vmem:[%s4 + $0x20] sm:$0xff] %vm108, %v472
  %481 = vst.msk [vmem:[%s4 + $0x28] sm:$0xff] %vm108, %v473
  %482 = vst.msk [vmem:[%s4 + $0x30] sm:$0xff] %vm108, %v474
  %483 = vst.msk [vmem:[%s4 + $0x38] sm:$0xff] %vm108, %v475
  // Predicated region
  $region14: #{hebbian_encoder_forward.2} parent=0 // pred_check
    _
  $region15: #{hebbian_encoder_forward.2} parent=0 // pred_check_branch
    %485 = sbr.rel (0) target = $region17
  $region16: #{hebbian_encoder_forward.2} parent=0 // pred_region
    _
  $region17: #{hebbian_encoder_forward.2} parent=0 // pred_fallthru
    _
  // Predicated region
  $region18: #{hebbian_encoder_forward.2} parent=0 // pred_check
    _
  $region19: #{hebbian_encoder_forward.2} parent=0 // pred_check_branch
    %487 = sbr.rel (0) target = $region21
  $region20: #{hebbian_encoder_forward.2} parent=0 // pred_region
    _
  $region21: #{hebbian_encoder_forward.2} parent=0 // pred_fallthru
    _
  // Predicated region
  $region22: #{hebbian_encoder_forward.2} parent=0 // pred_check
    _
  $region23: #{hebbian_encoder_forward.2} parent=0 // pred_check_branch
    %489 = sbr.rel (0) target = $region25
  $region24: #{hebbian_encoder_forward.2} parent=0 // pred_region
    _
  $region25: #{hebbian_encoder_forward.2} parent=0 // pred_fallthru
    _
  // Predicated region
  $region26: #{hebbian_encoder_forward.2} parent=0 // pred_check
    _
  $region27: #{hebbian_encoder_forward.2} parent=0 // pred_check_branch
    %491 = sbr.rel (0) target = $region29
  $region28: #{hebbian_encoder_forward.2} parent=0 // pred_region
    _
  $region29: #{hebbian_encoder_forward.2} parent=0 // pred_fallthru
    _

// kernel: hebbian_encoder_forward.3
$region0: #{hebbian_encoder_forward.3}
  #allocation0 [shape = 'u32[]', space=smem, size = 0x4, offset = 0x4, fixed_abs, tag = 'smem constant byte address 0x4 - core index']
  #allocation1 [shape = 'u32[144,128]{1,0:T(1,128)}', space=vmem, size = 0x12000, scoped, tag = 'internal scratch']
  %s0 = inlined_call_operand.vmem [shape: f32[8,2,64], index: 0, kind: input, shape index: {}]
  %s1 = inlined_call_operand.vmem [shape: f32[8,64,64], index: 1, kind: input, shape index: {}]
  %s2 = inlined_call_operand.vmem [shape: f32[64,64], index: 2, kind: input, shape index: {}]
  %s3 = inlined_call_operand.hbm [shape: f32[8,64,64], index: 3, kind: output, shape index: {0}]
  %s4 = inlined_call_operand.vmem [shape: f32[8,2,64], index: 4, kind: output, shape index: {1}]
  %5 = xla_tuple %s3, %s4
  %s6 = sld [smem:[#allocation0]]
  $region30: #{hebbian_encoder_forward.3} parent=0
    _
  %s8 = ssub.s32 1, %s6
  %s9 = scalar_select 0, %s8, %s6
  $region1: #{hebbian_encoder_forward.3} parent=0
    #allocation2 [shape = 'u8[262144]{0}', space=vmem, size = 0x40000, scoped, tag = 'output window, operand 0, single buffered']
    #allocation3 [shape = 's32[1]{0}', space=sflag, size = 0x4, scoped, tag = 'scoped memory for hebbian_encoder_forward.3']
    %10 = vsyncpa [#allocation3], 0
    // Predicated region
    $region2: #{hebbian_encoder_forward.3} parent=1 // pred_check
      _
    $region3: #{hebbian_encoder_forward.3} parent=1 // pred_check_branch
      %12 = sbr.rel (0) target = $region5
    $region4: #{hebbian_encoder_forward.3} parent=1 // pred_region
      _
    $region5: #{hebbian_encoder_forward.3} parent=1 // pred_fallthru
      _
    // Predicated region
    $region6: #{hebbian_encoder_forward.3} parent=1 // pred_check
      _
    $region7: #{hebbian_encoder_forward.3} parent=1 // pred_check_branch
      %14 = sbr.rel (0) target = $region9
    $region8: #{hebbian_encoder_forward.3} parent=1 // pred_region
      _
    $region9: #{hebbian_encoder_forward.3} parent=1 // pred_fallthru
      _
    // Predicated region
    $region10: #{hebbian_encoder_forward.3} parent=1 // pred_check
      _
    $region11: #{hebbian_encoder_forward.3} parent=1 // pred_check_branch
      %16 = sbr.rel (0) target = $region13
    $region12: #{hebbian_encoder_forward.3} parent=1 // pred_region
      _
    $region13: #{hebbian_encoder_forward.3} parent=1 // pred_fallthru
      _
    %v17 = vld [vmem:[%s2] sm:$0xff]
    %v18 = vld [vmem:[%s2 + $0x8] sm:$0xff]
    %v19 = vld [vmem:[%s2 + $0x10] sm:$0xff]
    %v20 = vld [vmem:[%s2 + $0x18] sm:$0xff]
    %v21 = vld [vmem:[%s2 + $0x20] sm:$0xff]
    %v22 = vld [vmem:[%s2 + $0x28] sm:$0xff]
    %v23 = vld [vmem:[%s2 + $0x30] sm:$0xff]
    %v24 = vld [vmem:[%s2 + $0x38] sm:$0xff]
    %v25 = vld [vmem:[%s1] sm:$0xff]
    %v26 = vld [vmem:[%s1 + $0x8] sm:$0xff]
    %v27 = vld [vmem:[%s1 + $0x10] sm:$0xff]
    %v28 = vld [vmem:[%s1 + $0x18] sm:$0xff]
    %v29 = vld [vmem:[%s1 + $0x20] sm:$0xff]
    %v30 = vld [vmem:[%s1 + $0x28] sm:$0xff]
    %v31 = vld [vmem:[%s1 + $0x30] sm:$0xff]
    %v32 = vld [vmem:[%s1 + $0x38] sm:$0xff]
    %v33 = vadd.f32 %v25, %v17
    %v34 = vadd.f32 %v26, %v18
    %v35 = vadd.f32 %v27, %v19
    %v36 = vadd.f32 %v28, %v20
    %v37 = vadd.f32 %v29, %v21
    %v38 = vadd.f32 %v30, %v22
    %v39 = vadd.f32 %v31, %v23
    %v40 = vadd.f32 %v32, %v24
    %v41 = vmax.f32 %v33, -1.0
    %v42 = vmax.f32 %v34, -1.0
    %v43 = vmax.f32 %v35, -1.0
    %v44 = vmax.f32 %v36, -1.0
    %v45 = vmax.f32 %v37, -1.0
    %v46 = vmax.f32 %v38, -1.0
    %v47 = vmax.f32 %v39, -1.0
    %v48 = vmax.f32 %v40, -1.0
    %v49 = vmin.f32 %v41, 1.0
    %v50 = vmin.f32 %v42, 1.0
    %v51 = vmin.f32 %v43, 1.0
    %v52 = vmin.f32 %v44, 1.0
    %v53 = vmin.f32 %v45, 1.0
    %v54 = vmin.f32 %v46, 1.0
    %v55 = vmin.f32 %v47, 1.0
    %v56 = vmin.f32 %v48, 1.0
    %vm57 = vcmask 523264
    %58 = vst.msk [vmem:[#allocation2] sm:$0xff] %vm57, %v49
    %59 = vst.msk [vmem:[#allocation2 + $0x8] sm:$0xff] %vm57, %v50
    %60 = vst.msk [vmem:[#allocation2 + $0x10] sm:$0xff] %vm57, %v51
    %61 = vst.msk [vmem:[#allocation2 + $0x18] sm:$0xff] %vm57, %v52
    %62 = vst.msk [vmem:[#allocation2 + $0x20] sm:$0xff] %vm57, %v53
    %63 = vst.msk [vmem:[#allocation2 + $0x28] sm:$0xff] %vm57, %v54
    %64 = vst.msk [vmem:[#allocation2 + $0x30] sm:$0xff] %vm57, %v55
    %65 = vst.msk [vmem:[#allocation2 + $0x38] sm:$0xff] %vm57, %v56
    %v66 = vld [vmem:[%s0] sm:$0x3]
    %v68 = vsel %vm57, %v66, 0
    %70 = vmatprep.subr.mxu0 0.0
    %71 = vmatpush1.msra.mxu0 %v49
    %72 = vmatprep.subr.mxu0 0.0
    %73 = vmatpush1.msra.mxu0 %v50
    %74 = vmatprep.subr.mxu0 0.0
    %75 = vmatpush1.msra.mxu0 %v51
    %76 = vmatprep.subr.mxu0 0.0
    %77 = vmatpush1.msra.mxu0 %v52
    %78 = vmatprep.subr.mxu0 0.0
    %79 = vmatpush1.msra.mxu0 %v53
    %80 = vmatprep.subr.mxu0 0.0
    %81 = vmatpush1.msra.mxu0 %v54
    %82 = vmatprep.subr.mxu0 0.0
    %83 = vmatpush1.msra.mxu0 %v55
    %84 = vmatprep.subr.mxu0 0.0
    %85 = vmatpush1.msra.mxu0 %v56
    %86 = vmatprep.subr.mxu0 0.0
    %87 = vmatpush1.msra.mxu0 0.0
    %88 = vmatprep.subr.mxu0 0.0
    %89 = vmatpush1.msra.mxu0 0.0
    %90 = vmatprep.subr.mxu0 0.0
    %91 = vmatpush1.msra.mxu0 0.0
    %92 = vmatprep.subr.mxu0 0.0
    %93 = vmatpush1.msra.mxu0 0.0
    %94 = vmatprep.subr.mxu0 0.0
    %95 = vmatpush1.msra.mxu0 0.0
    %96 = vmatprep.subr.mxu0 0.0
    %97 = vmatpush1.msra.mxu0 0.0
    %98 = vmatprep.subr.mxu0 0.0
    %99 = vmatpush1.msra.mxu0 0.0
    %100 = vmatprep.subr.mxu0 0.0
    %101 = vmatpush1.msra.mxu0 0.0
    %102 = vmatprep.subr.mxu0 0.0
    %103 = vmatpush1.msra.mxu0 0.0
    %104 = vmatprep.subr.mxu0 0.0
    %105 = vmatpush1.msra.mxu0 0.0
    %106 = vmatprep.subr.mxu0 0.0
    %107 = vmatpush1.msra.mxu0 0.0
    %108 = vmatprep.subr.mxu0 0.0
    %109 = vmatpush1.msra.mxu0 0.0
    %110 = vmatprep.subr.mxu0 0.0
    %111 = vmatpush1.msra.mxu0 0.0
    %112 = vmatprep.subr.mxu0 0.0
    %113 = vmatpush1.msra.mxu0 0.0
    %114 = vmatprep.subr.mxu0 0.0
    %115 = vmatpush1.msra.mxu0 0.0
    %116 = vmatprep.subr.mxu0 0.0
    %117 = vmatpush1.msra.mxu0 0.0
    %118 = vmatprep.subr.mxu0 0.0
    %119 = vmatpush1.msra.mxu0 0.0
    %120 = vmatprep.subr.mxu0 0.0
    %121 = vmatpush1.msra.mxu0 0.0
    %122 = vmatprep.subr.mxu0 0.0
    %123 = vmatpush1.msra.mxu0 0.0
    %124 = vmatprep.subr.mxu0 0.0
    %125 = vmatpush1.msra.mxu0 0.0
    %126 = vmatprep.subr.mxu0 0.0
    %127 = vmatpush1.msra.mxu0 0.0
    %128 = vmatprep.subr.mxu0 0.0
    %129 = vmatpush1.msra.mxu0 0.0
    %130 = vmatprep.subr.mxu0 0.0
    %131 = vmatpush1.msra.mxu0 0.0
    %132 = vmatprep.subr.mxu0 0.0
    %133 = vmatpush1.msra.mxu0 0.0
    %134 = vmatprep.mubr.f32.mxu0 0.0
    %135 = vmatmul.mubr.f32.gmra.mrb[0].mxu0 %v68
    %v136 = vpop.f32.mrb[0].mxu0
    %v137 = vadd.f32 0.0, %v136
    %v138 = vpop.f32.mrb[0].mxu0
    %139 = vdwg.mxu0
    %vm140 = vcmask 517120
    %v141 = vsel %vm140, %v137, 0.0
    %142 = vadd.xlane.f32.xlu0 %v141
    %v143 = vpop.xlane.xlu0 %142
    %v144 = vrcp.pop 64.0
    %v145 = vmul.f32 %v143, %v144
    %v146 = vsub.f32 %v137, %v145
    %v147 = vadd.f32 %v66, %v146
    %148 = vst.msk [vmem:[%s4] sm:$0x3] %vm140, %v147
    %s149 = scalar_lea.vmem %s1, 64
    %v150 = vld [vmem:[%s149] sm:$0xff]
    %v151 = vld [vmem:[%s149 + $0x8] sm:$0xff]
    %v152 = vld [vmem:[%s149 + $0x10] sm:$0xff]
    %v153 = vld [vmem:[%s149 + $0x18] sm:$0xff]
    %v154 = vld [vmem:[%s149 + $0x20] sm:$0xff]
    %v155 = vld [vmem:[%s149 + $0x28] sm:$0xff]
    %v156 = vld [vmem:[%s149 + $0x30] sm:$0xff]
    %v157 = vld [vmem:[%s149 + $0x38] sm:$0xff]
    %v158 = vadd.f32 %v150, %v17
    %v159 = vadd.f32 %v151, %v18
    %v160 = vadd.f32 %v152, %v19
    %v161 = vadd.f32 %v153, %v20
    %v162 = vadd.f32 %v154, %v21
    %v163 = vadd.f32 %v155, %v22
    %v164 = vadd.f32 %v156, %v23
    %v165 = vadd.f32 %v157, %v24
    %v166 = vmax.f32 %v158, -1.0
    %v167 = vmax.f32 %v159, -1.0
    %v168 = vmax.f32 %v160, -1.0
    %v169 = vmax.f32 %v161, -1.0
    %v170 = vmax.f32 %v162, -1.0
    %v171 = vmax.f32 %v163, -1.0
    %v172 = vmax.f32 %v164, -1.0
    %v173 = vmax.f32 %v165, -1.0
    %v174 = vmin.f32 %v166, 1.0
    %v175 = vmin.f32 %v167, 1.0
    %v176 = vmin.f32 %v168, 1.0
    %v177 = vmin.f32 %v169, 1.0
    %v178 = vmin.f32 %v170, 1.0
    %v179 = vmin.f32 %v171, 1.0
    %v180 = vmin.f32 %v172, 1.0
    %v181 = vmin.f32 %v173, 1.0
    %s182 = scalar_lea.vmem [#allocation2], 64
    %183 = vst.msk [vmem:[%s182] sm:$0xff] %vm57, %v174
    %184 = vst.msk [vmem:[%s182 + $0x8] sm:$0xff] %vm57, %v175
    %185 = vst.msk [vmem:[%s182 + $0x10] sm:$0xff] %vm57, %v176
    %186 = vst.msk [vmem:[%s182 + $0x18] sm:$0xff] %vm57, %v177
    %187 = vst.msk [vmem:[%s182 + $0x20] sm:$0xff] %vm57, %v178
    %188 = vst.msk [vmem:[%s182 + $0x28] sm:$0xff] %vm57, %v179
    %189 = vst.msk [vmem:[%s182 + $0x30] sm:$0xff] %vm57, %v180
    %190 = vst.msk [vmem:[%s182 + $0x38] sm:$0xff] %vm57, %v181
    %s191 = scalar_lea.vmem %s0, 2
    %v192 = vld [vmem:[%s191] sm:$0x3]
    %v194 = vsel %vm57, %v192, 0
    %196 = vmatprep.subr.mxu0 0.0
    %197 = vmatpush1.msra.mxu0 %v174
    %198 = vmatprep.subr.mxu0 0.0
    %199 = vmatpush1.msra.mxu0 %v175
    %200 = vmatprep.subr.mxu0 0.0
    %201 = vmatpush1.msra.mxu0 %v176
    %202 = vmatprep.subr.mxu0 0.0
    %203 = vmatpush1.msra.mxu0 %v177
    %204 = vmatprep.subr.mxu0 0.0
    %205 = vmatpush1.msra.mxu0 %v178
    %206 = vmatprep.subr.mxu0 0.0
    %207 = vmatpush1.msra.mxu0 %v179
    %208 = vmatprep.subr.mxu0 0.0
    %209 = vmatpush1.msra.mxu0 %v180
    %210 = vmatprep.subr.mxu0 0.0
    %211 = vmatpush1.msra.mxu0 %v181
    %212 = vmatprep.subr.mxu0 0.0
    %213 = vmatpush1.msra.mxu0 0.0
    %214 = vmatprep.subr.mxu0 0.0
    %215 = vmatpush1.msra.mxu0 0.0
    %216 = vmatprep.subr.mxu0 0.0
    %217 = vmatpush1.msra.mxu0 0.0
    %218 = vmatprep.subr.mxu0 0.0
    %219 = vmatpush1.msra.mxu0 0.0
    %220 = vmatprep.subr.mxu0 0.0
    %221 = vmatpush1.msra.mxu0 0.0
    %222 = vmatprep.subr.mxu0 0.0
    %223 = vmatpush1.msra.mxu0 0.0
    %224 = vmatprep.subr.mxu0 0.0
    %225 = vmatpush1.msra.mxu0 0.0
    %226 = vmatprep.subr.mxu0 0.0
    %227 = vmatpush1.msra.mxu0 0.0
    %228 = vmatprep.subr.mxu0 0.0
    %229 = vmatpush1.msra.mxu0 0.0
    %230 = vmatprep.subr.mxu0 0.0
    %231 = vmatpush1.msra.mxu0 0.0
    %232 = vmatprep.subr.mxu0 0.0
    %233 = vmatpush1.msra.mxu0 0.0
    %234 = vmatprep.subr.mxu0 0.0
    %235 = vmatpush1.msra.mxu0 0.0
    %236 = vmatprep.subr.mxu0 0.0
    %237 = vmatpush1.msra.mxu0 0.0
    %238 = vmatprep.subr.mxu0 0.0
    %239 = vmatpush1.msra.mxu0 0.0
    %240 = vmatprep.subr.mxu0 0.0
    %241 = vmatpush1.msra.mxu0 0.0
    %242 = vmatprep.subr.mxu0 0.0
    %243 = vmatpush1.msra.mxu0 0.0
    %244 = vmatprep.subr.mxu0 0.0
    %245 = vmatpush1.msra.mxu0 0.0
    %246 = vmatprep.subr.mxu0 0.0
    %247 = vmatpush1.msra.mxu0 0.0
    %248 = vmatprep.subr.mxu0 0.0
    %249 = vmatpush1.msra.mxu0 0.0
    %250 = vmatprep.subr.mxu0 0.0
    %251 = vmatpush1.msra.mxu0 0.0
    %252 = vmatprep.subr.mxu0 0.0
    %253 = vmatpush1.msra.mxu0 0.0
    %254 = vmatprep.subr.mxu0 0.0
    %255 = vmatpush1.msra.mxu0 0.0
    %256 = vmatprep.subr.mxu0 0.0
    %257 = vmatpush1.msra.mxu0 0.0
    %258 = vmatprep.subr.mxu0 0.0
    %259 = vmatpush1.msra.mxu0 0.0
    %260 = vmatprep.mubr.f32.mxu0 0.0
    %261 = vmatmul.mubr.f32.gmra.mrb[0].mxu0 %v194
    %v262 = vpop.f32.mrb[0].mxu0
    %v263 = vadd.f32 0.0, %v262
    %v264 = vpop.f32.mrb[0].mxu0
    %265 = vdwg.mxu0
    %v266 = vsel %vm140, %v263, 0.0
    %267 = vadd.xlane.f32.xlu0 %v266
    %v268 = vpop.xlane.xlu0 %267
    %v269 = vmul.f32 %v268, %v144
    %v270 = vsub.f32 %v263, %v269
    %v271 = vadd.f32 %v192, %v270
    %s272 = scalar_lea.vmem %s4, 2
    %273 = vst.msk [vmem:[%s272] sm:$0x3] %vm140, %v271
    %s274 = scalar_lea.vmem %s1, 128
    %v275 = vld [vmem:[%s274] sm:$0xff]
    %v276 = vld [vmem:[%s274 + $0x8] sm:$0xff]
    %v277 = vld [vmem:[%s274 + $0x10] sm:$0xff]
    %v278 = vld [vmem:[%s274 + $0x18] sm:$0xff]
    %v279 = vld [vmem:[%s274 + $0x20] sm:$0xff]
    %v280 = vld [vmem:[%s274 + $0x28] sm:$0xff]
    %v281 = vld [vmem:[%s274 + $0x30] sm:$0xff]
    %v282 = vld [vmem:[%s274 + $0x38] sm:$0xff]
    %v283 = vadd.f32 %v275, %v17
    %v284 = vadd.f32 %v276, %v18
    %v285 = vadd.f32 %v277, %v19
    %v286 = vadd.f32 %v278, %v20
    %v287 = vadd.f32 %v279, %v21
    %v288 = vadd.f32 %v280, %v22
    %v289 = vadd.f32 %v281, %v23
    %v290 = vadd.f32 %v282, %v24
    %v291 = vmax.f32 %v283, -1.0
    %v292 = vmax.f32 %v284, -1.0
    %v293 = vmax.f32 %v285, -1.0
    %v294 = vmax.f32 %v286, -1.0
    %v295 = vmax.f32 %v287, -1.0
    %v296 = vmax.f32 %v288, -1.0
    %v297 = vmax.f32 %v289, -1.0
    %v298 = vmax.f32 %v290, -1.0
    %v299 = vmin.f32 %v291, 1.0
    %v300 = vmin.f32 %v292, 1.0
    %v301 = vmin.f32 %v293, 1.0
    %v302 = vmin.f32 %v294, 1.0
    %v303 = vmin.f32 %v295, 1.0
    %v304 = vmin.f32 %v296, 1.0
    %v305 = vmin.f32 %v297, 1.0
    %v306 = vmin.f32 %v298, 1.0
    %s307 = scalar_lea.vmem [#allocation2], 128
    %308 = vst.msk [vmem:[%s307] sm:$0xff] %vm57, %v299
    %309 = vst.msk [vmem:[%s307 + $0x8] sm:$0xff] %vm57, %v300
    %310 = vst.msk [vmem:[%s307 + $0x10] sm:$0xff] %vm57, %v301
    %311 = vst.msk [vmem:[%s307 + $0x18] sm:$0xff] %vm57, %v302
    %312 = vst.msk [vmem:[%s307 + $0x20] sm:$0xff] %vm57, %v303
    %313 = vst.msk [vmem:[%s307 + $0x28] sm:$0xff] %vm57, %v304
    %314 = vst.msk [vmem:[%s307 + $0x30] sm:$0xff] %vm57, %v305
    %315 = vst.msk [vmem:[%s307 + $0x38] sm:$0xff] %vm57, %v306
    %s316 = scalar_lea.vmem %s0, 4
    %v317 = vld [vmem:[%s316] sm:$0x3]
    %v319 = vsel %vm57, %v317, 0
    %321 = vmatprep.subr.mxu0 0.0
    %322 = vmatpush1.msra.mxu0 %v299
    %323 = vmatprep.subr.mxu0 0.0
    %324 = vmatpush1.msra.mxu0 %v300
    %325 = vmatprep.subr.mxu0 0.0
    %326 = vmatpush1.msra.mxu0 %v301
    %327 = vmatprep.subr.mxu0 0.0
    %328 = vmatpush1.msra.mxu0 %v302
    %329 = vmatprep.subr.mxu0 0.0
    %330 = vmatpush1.msra.mxu0 %v303
    %331 = vmatprep.subr.mxu0 0.0
    %332 = vmatpush1.msra.mxu0 %v304
    %333 = vmatprep.subr.mxu0 0.0
    %334 = vmatpush1.msra.mxu0 %v305
    %335 = vmatprep.subr.mxu0 0.0
    %336 = vmatpush1.msra.mxu0 %v306
    %337 = vmatprep.subr.mxu0 0.0
    %338 = vmatpush1.msra.mxu0 0.0
    %339 = vmatprep.subr.mxu0 0.0
    %340 = vmatpush1.msra.mxu0 0.0
    %341 = vmatprep.subr.mxu0 0.0
    %342 = vmatpush1.msra.mxu0 0.0
    %343 = vmatprep.subr.mxu0 0.0
    %344 = vmatpush1.msra.mxu0 0.0
    %345 = vmatprep.subr.mxu0 0.0
    %346 = vmatpush1.msra.mxu0 0.0
    %347 = vmatprep.subr.mxu0 0.0
    %348 = vmatpush1.msra.mxu0 0.0
    %349 = vmatprep.subr.mxu0 0.0
    %350 = vmatpush1.msra.mxu0 0.0
    %351 = vmatprep.subr.mxu0 0.0
    %352 = vmatpush1.msra.mxu0 0.0
    %353 = vmatprep.subr.mxu0 0.0
    %354 = vmatpush1.msra.mxu0 0.0
    %355 = vmatprep.subr.mxu0 0.0
    %356 = vmatpush1.msra.mxu0 0.0
    %357 = vmatprep.subr.mxu0 0.0
    %358 = vmatpush1.msra.mxu0 0.0
    %359 = vmatprep.subr.mxu0 0.0
    %360 = vmatpush1.msra.mxu0 0.0
    %361 = vmatprep.subr.mxu0 0.0
    %362 = vmatpush1.msra.mxu0 0.0
    %363 = vmatprep.subr.mxu0 0.0
    %364 = vmatpush1.msra.mxu0 0.0
    %365 = vmatprep.subr.mxu0 0.0
    %366 = vmatpush1.msra.mxu0 0.0
    %367 = vmatprep.subr.mxu0 0.0
    %368 = vmatpush1.msra.mxu0 0.0
    %369 = vmatprep.subr.mxu0 0.0
    %370 = vmatpush1.msra.mxu0 0.0
    %371 = vmatprep.subr.mxu0 0.0
    %372 = vmatpush1.msra.mxu0 0.0
    %373 = vmatprep.subr.mxu0 0.0
    %374 = vmatpush1.msra.mxu0 0.0
    %375 = vmatprep.subr.mxu0 0.0
    %376 = vmatpush1.msra.mxu0 0.0
    %377 = vmatprep.subr.mxu0 0.0
    %378 = vmatpush1.msra.mxu0 0.0
    %379 = vmatprep.subr.mxu0 0.0
    %380 = vmatpush1.msra.mxu0 0.0
    %381 = vmatprep.subr.mxu0 0.0
    %382 = vmatpush1.msra.mxu0 0.0
    %383 = vmatprep.subr.mxu0 0.0
    %384 = vmatpush1.msra.mxu0 0.0
    %385 = vmatprep.mubr.f32.mxu0 0.0
    %386 = vmatmul.mubr.f32.gmra.mrb[0].mxu0 %v319
    %v387 = vpop.f32.mrb[0].mxu0
    %v388 = vadd.f32 0.0, %v387
    %v389 = vpop.f32.mrb[0].mxu0
    %390 = vdwg.mxu0
    %v391 = vsel %vm140, %v388, 0.0
    %392 = vadd.xlane.f32.xlu0 %v391
    %v393 = vpop.xlane.xlu0 %392
    %v394 = vmul.f32 %v393, %v144
    %v395 = vsub.f32 %v388, %v394
    %v396 = vadd.f32 %v317, %v395
    %s397 = scalar_lea.vmem %s4, 4
    %398 = vst.msk [vmem:[%s397] sm:$0x3] %vm140, %v396
    %s399 = scalar_lea.vmem %s1, 192
    %v400 = vld [vmem:[%s399] sm:$0xff]
    %v401 = vld [vmem:[%s399 + $0x8] sm:$0xff]
    %v402 = vld [vmem:[%s399 + $0x10] sm:$0xff]
    %v403 = vld [vmem:[%s399 + $0x18] sm:$0xff]
    %v404 = vld [vmem:[%s399 + $0x20] sm:$0xff]
    %v405 = vld [vmem:[%s399 + $0x28] sm:$0xff]
    %v406 = vld [vmem:[%s399 + $0x30] sm:$0xff]
    %v407 = vld [vmem:[%s399 + $0x38] sm:$0xff]
    %v408 = vadd.f32 %v400, %v17
    %v409 = vadd.f32 %v401, %v18
    %v410 = vadd.f32 %v402, %v19
    %v411 = vadd.f32 %v403, %v20
    %v412 = vadd.f32 %v404, %v21
    %v413 = vadd.f32 %v405, %v22
    %v414 = vadd.f32 %v406, %v23
    %v415 = vadd.f32 %v407, %v24
    %v416 = vmax.f32 %v408, -1.0
    %v417 = vmax.f32 %v409, -1.0
    %v418 = vmax.f32 %v410, -1.0
    %v419 = vmax.f32 %v411, -1.0
    %v420 = vmax.f32 %v412, -1.0
    %v421 = vmax.f32 %v413, -1.0
    %v422 = vmax.f32 %v414, -1.0
    %v423 = vmax.f32 %v415, -1.0
    %v424 = vmin.f32 %v416, 1.0
    %v425 = vmin.f32 %v417, 1.0
    %v426 = vmin.f32 %v418, 1.0
    %v427 = vmin.f32 %v419, 1.0
    %v428 = vmin.f32 %v420, 1.0
    %v429 = vmin.f32 %v421, 1.0
    %v430 = vmin.f32 %v422, 1.0
    %v431 = vmin.f32 %v423, 1.0
    %s432 = scalar_lea.vmem [#allocation2], 192
    %433 = vst.msk [vmem:[%s432] sm:$0xff] %vm57, %v424
    %434 = vst.msk [vmem:[%s432 + $0x8] sm:$0xff] %vm57, %v425
    %435 = vst.msk [vmem:[%s432 + $0x10] sm:$0xff] %vm57, %v426
    %436 = vst.msk [vmem:[%s432 + $0x18] sm:$0xff] %vm57, %v427
    %437 = vst.msk [vmem:[%s432 + $0x20] sm:$0xff] %vm57, %v428
    %438 = vst.msk [vmem:[%s432 + $0x28] sm:$0xff] %vm57, %v429
    %439 = vst.msk [vmem:[%s432 + $0x30] sm:$0xff] %vm57, %v430
    %440 = vst.msk [vmem:[%s432 + $0x38] sm:$0xff] %vm57, %v431
    %s441 = scalar_lea.vmem %s0, 6
    %v442 = vld [vmem:[%s441] sm:$0x3]
    %v444 = vsel %vm57, %v442, 0
    %446 = vmatprep.subr.mxu0 0.0
    %447 = vmatpush1.msra.mxu0 %v424
    %448 = vmatprep.subr.mxu0 0.0
    %449 = vmatpush1.msra.mxu0 %v425
    %450 = vmatprep.subr.mxu0 0.0
    %451 = vmatpush1.msra.mxu0 %v426
    %452 = vmatprep.subr.mxu0 0.0
    %453 = vmatpush1.msra.mxu0 %v427
    %454 = vmatprep.subr.mxu0 0.0
    %455 = vmatpush1.msra.mxu0 %v428
    %456 = vmatprep.subr.mxu0 0.0
    %457 = vmatpush1.msra.mxu0 %v429
    %458 = vmatprep.subr.mxu0 0.0
    %459 = vmatpush1.msra.mxu0 %v430
    %460 = vmatprep.subr.mxu0 0.0
    %461 = vmatpush1.msra.mxu0 %v431
    %462 = vmatprep.subr.mxu0 0.0
    %463 = vmatpush1.msra.mxu0 0.0
    %464 = vmatprep.subr.mxu0 0.0
    %465 = vmatpush1.msra.mxu0 0.0
    %466 = vmatprep.subr.mxu0 0.0
    %467 = vmatpush1.msra.mxu0 0.0
    %468 = vmatprep.subr.mxu0 0.0
    %469 = vmatpush1.msra.mxu0 0.0
    %470 = vmatprep.subr.mxu0 0.0
    %471 = vmatpush1.msra.mxu0 0.0
    %472 = vmatprep.subr.mxu0 0.0
    %473 = vmatpush1.msra.mxu0 0.0
    %474 = vmatprep.subr.mxu0 0.0
    %475 = vmatpush1.msra.mxu0 0.0
    %476 = vmatprep.subr.mxu0 0.0
    %477 = vmatpush1.msra.mxu0 0.0
    %478 = vmatprep.subr.mxu0 0.0
    %479 = vmatpush1.msra.mxu0 0.0
    %480 = vmatprep.subr.mxu0 0.0
    %481 = vmatpush1.msra.mxu0 0.0
    %482 = vmatprep.subr.mxu0 0.0
    %483 = vmatpush1.msra.mxu0 0.0
    %484 = vmatprep.subr.mxu0 0.0
    %485 = vmatpush1.msra.mxu0 0.0
    %486 = vmatprep.subr.mxu0 0.0
    %487 = vmatpush1.msra.mxu0 0.0
    %488 = vmatprep.subr.mxu0 0.0
    %489 = vmatpush1.msra.mxu0 0.0
    %490 = vmatprep.subr.mxu0 0.0
    %491 = vmatpush1.msra.mxu0 0.0
    %492 = vmatprep.subr.mxu0 0.0
    %493 = vmatpush1.msra.mxu0 0.0
    %494 = vmatprep.subr.mxu0 0.0
    %495 = vmatpush1.msra.mxu0 0.0
    %496 = vmatprep.subr.mxu0 0.0
    %497 = vmatpush1.msra.mxu0 0.0
    %498 = vmatprep.subr.mxu0 0.0
    %499 = vmatpush1.msra.mxu0 0.0
    %500 = vmatprep.subr.mxu0 0.0
    %501 = vmatpush1.msra.mxu0 0.0
    %502 = vmatprep.subr.mxu0 0.0
    %503 = vmatpush1.msra.mxu0 0.0
    %504 = vmatprep.subr.mxu0 0.0
    %505 = vmatpush1.msra.mxu0 0.0
    %506 = vmatprep.subr.mxu0 0.0
    %507 = vmatpush1.msra.mxu0 0.0
    %508 = vmatprep.subr.mxu0 0.0
    %509 = vmatpush1.msra.mxu0 0.0
    %510 = vmatprep.mubr.f32.mxu0 0.0
    %511 = vmatmul.mubr.f32.gmra.mrb[0].mxu0 %v444
    %v512 = vpop.f32.mrb[0].mxu0
    %v513 = vadd.f32 0.0, %v512
    %v514 = vpop.f32.mrb[0].mxu0
    %515 = vdwg.mxu0
    %v516 = vsel %vm140, %v513, 0.0
    %517 = vadd.xlane.f32.xlu0 %v516
    %v518 = vpop.xlane.xlu0 %517
    %v519 = vmul.f32 %v518, %v144
    %v520 = vsub.f32 %v513, %v519
    %v521 = vadd.f32 %v442, %v520
    %s522 = scalar_lea.vmem %s4, 6
    %523 = vst.msk [vmem:[%s522] sm:$0x3] %vm140, %v521
    %s524 = scalar_lea.vmem %s1, 256
    %v525 = vld [vmem:[%s524] sm:$0xff]
    %v526 = vld [vmem:[%s524 + $0x8] sm:$0xff]
    %v527 = vld [vmem:[%s524 + $0x10] sm:$0xff]
    %v528 = vld [vmem:[%s524 + $0x18] sm:$0xff]
    %v529 = vld [vmem:[%s524 + $0x20] sm:$0xff]
    %v530 = vld [vmem:[%s524 + $0x28] sm:$0xff]
    %v531 = vld [vmem:[%s524 + $0x30] sm:$0xff]
    %v532 = vld [vmem:[%s524 + $0x38] sm:$0xff]
    %v533 = vadd.f32 %v525, %v17
    %v534 = vadd.f32 %v526, %v18
    %v535 = vadd.f32 %v527, %v19
    %v536 = vadd.f32 %v528, %v20
    %v537 = vadd.f32 %v529, %v21
    %v538 = vadd.f32 %v530, %v22
    %v539 = vadd.f32 %v531, %v23
    %v540 = vadd.f32 %v532, %v24
    %v541 = vmax.f32 %v533, -1.0
    %v542 = vmax.f32 %v534, -1.0
    %v543 = vmax.f32 %v535, -1.0
    %v544 = vmax.f32 %v536, -1.0
    %v545 = vmax.f32 %v537, -1.0
    %v546 = vmax.f32 %v538, -1.0
    %v547 = vmax.f32 %v539, -1.0
    %v548 = vmax.f32 %v540, -1.0
    %v549 = vmin.f32 %v541, 1.0
    %v550 = vmin.f32 %v542, 1.0
    %v551 = vmin.f32 %v543, 1.0
    %v552 = vmin.f32 %v544, 1.0
    %v553 = vmin.f32 %v545, 1.0
    %v554 = vmin.f32 %v546, 1.0
    %v555 = vmin.f32 %v547, 1.0
    %v556 = vmin.f32 %v548, 1.0
    %s557 = scalar_lea.vmem [#allocation2], 256
    %558 = vst.msk [vmem:[%s557] sm:$0xff] %vm57, %v549
    %559 = vst.msk [vmem:[%s557 + $0x8] sm:$0xff] %vm57, %v550
    %560 = vst.msk [vmem:[%s557 + $0x10] sm:$0xff] %vm57, %v551
    %561 = vst.msk [vmem:[%s557 + $0x18] sm:$0xff] %vm57, %v552
    %562 = vst.msk [vmem:[%s557 + $0x20] sm:$0xff] %vm57, %v553
    %563 = vst.msk [vmem:[%s557 + $0x28] sm:$0xff] %vm57, %v554
    %564 = vst.msk [vmem:[%s557 + $0x30] sm:$0xff] %vm57, %v555
    %565 = vst.msk [vmem:[%s557 + $0x38] sm:$0xff] %vm57, %v556
    %s566 = scalar_lea.vmem %s0, 8
    %v567 = vld [vmem:[%s566] sm:$0x3]
    %v569 = vsel %vm57, %v567, 0
    %571 = vmatprep.subr.mxu0 0.0
    %572 = vmatpush1.msra.mxu0 %v549
    %573 = vmatprep.subr.mxu0 0.0
    %574 = vmatpush1.msra.mxu0 %v550
    %575 = vmatprep.subr.mxu0 0.0
    %576 = vmatpush1.msra.mxu0 %v551
    %577 = vmatprep.subr.mxu0 0.0
    %578 = vmatpush1.msra.mxu0 %v552
    %579 = vmatprep.subr.mxu0 0.0
    %580 = vmatpush1.msra.mxu0 %v553
    %581 = vmatprep.subr.mxu0 0.0
    %582 = vmatpush1.msra.mxu0 %v554
    %583 = vmatprep.subr.mxu0 0.0
    %584 = vmatpush1.msra.mxu0 %v555
    %585 = vmatprep.subr.mxu0 0.0
    %586 = vmatpush1.msra.mxu0 %v556
    %587 = vmatprep.subr.mxu0 0.0
    %588 = vmatpush1.msra.mxu0 0.0
    %589 = vmatprep.subr.mxu0 0.0
    %590 = vmatpush1.msra.mxu0 0.0
    %591 = vmatprep.subr.mxu0 0.0
    %592 = vmatpush1.msra.mxu0 0.0
    %593 = vmatprep.subr.mxu0 0.0
    %594 = vmatpush1.msra.mxu0 0.0
    %595 = vmatprep.subr.mxu0 0.0
    %596 = vmatpush1.msra.mxu0 0.0
    %597 = vmatprep.subr.mxu0 0.0
    %598 = vmatpush1.msra.mxu0 0.0
    %599 = vmatprep.subr.mxu0 0.0
    %600 = vmatpush1.msra.mxu0 0.0
    %601 = vmatprep.subr.mxu0 0.0
    %602 = vmatpush1.msra.mxu0 0.0
    %603 = vmatprep.subr.mxu0 0.0
    %604 = vmatpush1.msra.mxu0 0.0
    %605 = vmatprep.subr.mxu0 0.0
    %606 = vmatpush1.msra.mxu0 0.0
    %607 = vmatprep.subr.mxu0 0.0
    %608 = vmatpush1.msra.mxu0 0.0
    %609 = vmatprep.subr.mxu0 0.0
    %610 = vmatpush1.msra.mxu0 0.0
    %611 = vmatprep.subr.mxu0 0.0
    %612 = vmatpush1.msra.mxu0 0.0
    %613 = vmatprep.subr.mxu0 0.0
    %614 = vmatpush1.msra.mxu0 0.0
    %615 = vmatprep.subr.mxu0 0.0
    %616 = vmatpush1.msra.mxu0 0.0
    %617 = vmatprep.subr.mxu0 0.0
    %618 = vmatpush1.msra.mxu0 0.0
    %619 = vmatprep.subr.mxu0 0.0
    %620 = vmatpush1.msra.mxu0 0.0
    %621 = vmatprep.subr.mxu0 0.0
    %622 = vmatpush1.msra.mxu0 0.0
    %623 = vmatprep.subr.mxu0 0.0
    %624 = vmatpush1.msra.mxu0 0.0
    %625 = vmatprep.subr.mxu0 0.0
    %626 = vmatpush1.msra.mxu0 0.0
    %627 = vmatprep.subr.mxu0 0.0
    %628 = vmatpush1.msra.mxu0 0.0
    %629 = vmatprep.subr.mxu0 0.0
    %630 = vmatpush1.msra.mxu0 0.0
    %631 = vmatprep.subr.mxu0 0.0
    %632 = vmatpush1.msra.mxu0 0.0
    %633 = vmatprep.subr.mxu0 0.0
    %634 = vmatpush1.msra.mxu0 0.0
    %635 = vmatprep.mubr.f32.mxu0 0.0
    %636 = vmatmul.mubr.f32.gmra.mrb[0].mxu0 %v569
    %v637 = vpop.f32.mrb[0].mxu0
    %v638 = vadd.f32 0.0, %v637
    %v639 = vpop.f32.mrb[0].mxu0
    %640 = vdwg.mxu0
    %v641 = vsel %vm140, %v638, 0.0
    %642 = vadd.xlane.f32.xlu0 %v641
    %v643 = vpop.xlane.xlu0 %642
    %v644 = vmul.f32 %v643, %v144
    %v645 = vsub.f32 %v638, %v644
    %v646 = vadd.f32 %v567, %v645
    %s647 = scalar_lea.vmem %s4, 8
    %648 = vst.msk [vmem:[%s647] sm:$0x3] %vm140, %v646
    %s649 = scalar_lea.vmem %s1, 320
    %v650 = vld [vmem:[%s649] sm:$0xff]
    %v651 = vld [vmem:[%s649 + $0x8] sm:$0xff]
    %v652 = vld [vmem:[%s649 + $0x10] sm:$0xff]
    %v653 = vld [vmem:[%s649 + $0x18] sm:$0xff]
    %v654 = vld [vmem:[%s649 + $0x20] sm:$0xff]
    %v655 = vld [vmem:[%s649 + $0x28] sm:$0xff]
    %v656 = vld [vmem:[%s649 + $0x30] sm:$0xff]
    %v657 = vld [vmem:[%s649 + $0x38] sm:$0xff]
    %v658 = vadd.f32 %v650, %v17
    %v659 = vadd.f32 %v651, %v18
    %v660 = vadd.f32 %v652, %v19
    %v661 = vadd.f32 %v653, %v20
    %v662 = vadd.f32 %v654, %v21
    %v663 = vadd.f32 %v655, %v22
    %v664 = vadd.f32 %v656, %v23
    %v665 = vadd.f32 %v657, %v24
    %v666 = vmax.f32 %v658, -1.0
    %v667 = vmax.f32 %v659, -1.0
    %v668 = vmax.f32 %v660, -1.0
    %v669 = vmax.f32 %v661, -1.0
    %v670 = vmax.f32 %v662, -1.0
    %v671 = vmax.f32 %v663, -1.0
    %v672 = vmax.f32 %v664, -1.0
    %v673 = vmax.f32 %v665, -1.0
    %v674 = vmin.f32 %v666, 1.0
    %v675 = vmin.f32 %v667, 1.0
    %v676 = vmin.f32 %v668, 1.0
    %v677 = vmin.f32 %v669, 1.0
    %v678 = vmin.f32 %v670, 1.0
    %v679 = vmin.f32 %v671, 1.0
    %v680 = vmin.f32 %v672, 1.0
    %v681 = vmin.f32 %v673, 1.0
    %s682 = scalar_lea.vmem [#allocation2], 320
    %683 = vst.msk [vmem:[%s682] sm:$0xff] %vm57, %v674
    %684 = vst.msk [vmem:[%s682 + $0x8] sm:$0xff] %vm57, %v675
    %685 = vst.msk [vmem:[%s682 + $0x10] sm:$0xff] %vm57, %v676
    %686 = vst.msk [vmem:[%s682 + $0x18] sm:$0xff] %vm57, %v677
    %687 = vst.msk [vmem:[%s682 + $0x20] sm:$0xff] %vm57, %v678
    %688 = vst.msk [vmem:[%s682 + $0x28] sm:$0xff] %vm57, %v679
    %689 = vst.msk [vmem:[%s682 + $0x30] sm:$0xff] %vm57, %v680
    %690 = vst.msk [vmem:[%s682 + $0x38] sm:$0xff] %vm57, %v681
    %s691 = scalar_lea.vmem %s0, 10
    %v692 = vld [vmem:[%s691] sm:$0x3]
    %v694 = vsel %vm57, %v692, 0
    %696 = vmatprep.subr.mxu0 0.0
    %697 = vmatpush1.msra.mxu0 %v674
    %698 = vmatprep.subr.mxu0 0.0
    %699 = vmatpush1.msra.mxu0 %v675
    %700 = vmatprep.subr.mxu0 0.0
    %701 = vmatpush1.msra.mxu0 %v676
    %702 = vmatprep.subr.mxu0 0.0
    %703 = vmatpush1.msra.mxu0 %v677
    %704 = vmatprep.subr.mxu0 0.0
    %705 = vmatpush1.msra.mxu0 %v678
    %706 = vmatprep.subr.mxu0 0.0
    %707 = vmatpush1.msra.mxu0 %v679
    %708 = vmatprep.subr.mxu0 0.0
    %709 = vmatpush1.msra.mxu0 %v680
    %710 = vmatprep.subr.mxu0 0.0
    %711 = vmatpush1.msra.mxu0 %v681
    %712 = vmatprep.subr.mxu0 0.0
    %713 = vmatpush1.msra.mxu0 0.0
    %714 = vmatprep.subr.mxu0 0.0
    %715 = vmatpush1.msra.mxu0 0.0
    %716 = vmatprep.subr.mxu0 0.0
    %717 = vmatpush1.msra.mxu0 0.0
    %718 = vmatprep.subr.mxu0 0.0
    %719 = vmatpush1.msra.mxu0 0.0
    %720 = vmatprep.subr.mxu0 0.0
    %721 = vmatpush1.msra.mxu0 0.0
    %722 = vmatprep.subr.mxu0 0.0
    %723 = vmatpush1.msra.mxu0 0.0
    %724 = vmatprep.subr.mxu0 0.0
    %725 = vmatpush1.msra.mxu0 0.0
    %726 = vmatprep.subr.mxu0 0.0
    %727 = vmatpush1.msra.mxu0 0.0
    %728 = vmatprep.subr.mxu0 0.0
    %729 = vmatpush1.msra.mxu0 0.0
    %730 = vmatprep.subr.mxu0 0.0
    %731 = vmatpush1.msra.mxu0 0.0
    %732 = vmatprep.subr.mxu0 0.0
    %733 = vmatpush1.msra.mxu0 0.0
    %734 = vmatprep.subr.mxu0 0.0
    %735 = vmatpush1.msra.mxu0 0.0
    %736 = vmatprep.subr.mxu0 0.0
    %737 = vmatpush1.msra.mxu0 0.0
    %738 = vmatprep.subr.mxu0 0.0
    %739 = vmatpush1.msra.mxu0 0.0
    %740 = vmatprep.subr.mxu0 0.0
    %741 = vmatpush1.msra.mxu0 0.0
    %742 = vmatprep.subr.mxu0 0.0
    %743 = vmatpush1.msra.mxu0 0.0
    %744 = vmatprep.subr.mxu0 0.0
    %745 = vmatpush1.msra.mxu0 0.0
    %746 = vmatprep.subr.mxu0 0.0
    %747 = vmatpush1.msra.mxu0 0.0
    %748 = vmatprep.subr.mxu0 0.0
    %749 = vmatpush1.msra.mxu0 0.0
    %750 = vmatprep.subr.mxu0 0.0
    %751 = vmatpush1.msra.mxu0 0.0
    %752 = vmatprep.subr.mxu0 0.0
    %753 = vmatpush1.msra.mxu0 0.0
    %754 = vmatprep.subr.mxu0 0.0
    %755 = vmatpush1.msra.mxu0 0.0
    %756 = vmatprep.subr.mxu0 0.0
    %757 = vmatpush1.msra.mxu0 0.0
    %758 = vmatprep.subr.mxu0 0.0
    %759 = vmatpush1.msra.mxu0 0.0
    %760 = vmatprep.mubr.f32.mxu0 0.0
    %761 = vmatmul.mubr.f32.gmra.mrb[0].mxu0 %v694
    %v762 = vpop.f32.mrb[0].mxu0
    %v763 = vadd.f32 0.0, %v762
    %v764 = vpop.f32.mrb[0].mxu0
    %765 = vdwg.mxu0
    %v766 = vsel %vm140, %v763, 0.0
    %767 = vadd.xlane.f32.xlu0 %v766
    %v768 = vpop.xlane.xlu0 %767
    %v769 = vmul.f32 %v768, %v144
    %v770 = vsub.f32 %v763, %v769
    %v771 = vadd.f32 %v692, %v770
    %s772 = scalar_lea.vmem %s4, 10
    %773 = vst.msk [vmem:[%s772] sm:$0x3] %vm140, %v771
    %s774 = scalar_lea.vmem %s1, 384
    %v775 = vld [vmem:[%s774] sm:$0xff]
    %v776 = vld [vmem:[%s774 + $0x8] sm:$0xff]
    %v777 = vld [vmem:[%s774 + $0x10] sm:$0xff]
    %v778 = vld [vmem:[%s774 + $0x18] sm:$0xff]
    %v779 = vld [vmem:[%s774 + $0x20] sm:$0xff]
    %v780 = vld [vmem:[%s774 + $0x28] sm:$0xff]
    %v781 = vld [vmem:[%s774 + $0x30] sm:$0xff]
    %v782 = vld [vmem:[%s774 + $0x38] sm:$0xff]
    %v783 = vadd.f32 %v775, %v17
    %v784 = vadd.f32 %v776, %v18
    %v785 = vadd.f32 %v777, %v19
    %v786 = vadd.f32 %v778, %v20
    %v787 = vadd.f32 %v779, %v21
    %v788 = vadd.f32 %v780, %v22
    %v789 = vadd.f32 %v781, %v23
    %v790 = vadd.f32 %v782, %v24
    %v791 = vmax.f32 %v783, -1.0
    %v792 = vmax.f32 %v784, -1.0
    %v793 = vmax.f32 %v785, -1.0
    %v794 = vmax.f32 %v786, -1.0
    %v795 = vmax.f32 %v787, -1.0
    %v796 = vmax.f32 %v788, -1.0
    %v797 = vmax.f32 %v789, -1.0
    %v798 = vmax.f32 %v790, -1.0
    %v799 = vmin.f32 %v791, 1.0
    %v800 = vmin.f32 %v792, 1.0
    %v801 = vmin.f32 %v793, 1.0
    %v802 = vmin.f32 %v794, 1.0
    %v803 = vmin.f32 %v795, 1.0
    %v804 = vmin.f32 %v796, 1.0
    %v805 = vmin.f32 %v797, 1.0
    %v806 = vmin.f32 %v798, 1.0
    %s807 = scalar_lea.vmem [#allocation2], 384
    %808 = vst.msk [vmem:[%s807] sm:$0xff] %vm57, %v799
    %809 = vst.msk [vmem:[%s807 + $0x8] sm:$0xff] %vm57, %v800
    %810 = vst.msk [vmem:[%s807 + $0x10] sm:$0xff] %vm57, %v801
    %811 = vst.msk [vmem:[%s807 + $0x18] sm:$0xff] %vm57, %v802
    %812 = vst.msk [vmem:[%s807 + $0x20] sm:$0xff] %vm57, %v803
    %813 = vst.msk [vmem:[%s807 + $0x28] sm:$0xff] %vm57, %v804
    %814 = vst.msk [vmem:[%s807 + $0x30] sm:$0xff] %vm57, %v805
    %815 = vst.msk [vmem:[%s807 + $0x38] sm:$0xff] %vm57, %v806
    %s816 = scalar_lea.vmem %s0, 12
    %v817 = vld [vmem:[%s816] sm:$0x3]
    %v819 = vsel %vm57, %v817, 0
    %821 = vmatprep.subr.mxu0 0.0
    %822 = vmatpush1.msra.mxu0 %v799
    %823 = vmatprep.subr.mxu0 0.0
    %824 = vmatpush1.msra.mxu0 %v800
    %825 = vmatprep.subr.mxu0 0.0
    %826 = vmatpush1.msra.mxu0 %v801
    %827 = vmatprep.subr.mxu0 0.0
    %828 = vmatpush1.msra.mxu0 %v802
    %829 = vmatprep.subr.mxu0 0.0
    %830 = vmatpush1.msra.mxu0 %v803
    %831 = vmatprep.subr.mxu0 0.0
    %832 = vmatpush1.msra.mxu0 %v804
    %833 = vmatprep.subr.mxu0 0.0
    %834 = vmatpush1.msra.mxu0 %v805
    %835 = vmatprep.subr.mxu0 0.0
    %836 = vmatpush1.msra.mxu0 %v806
    %837 = vmatprep.subr.mxu0 0.0
    %838 = vmatpush1.msra.mxu0 0.0
    %839 = vmatprep.subr.mxu0 0.0
    %840 = vmatpush1.msra.mxu0 0.0
    %841 = vmatprep.subr.mxu0 0.0
    %842 = vmatpush1.msra.mxu0 0.0
    %843 = vmatprep.subr.mxu0 0.0
    %844 = vmatpush1.msra.mxu0 0.0
    %845 = vmatprep.subr.mxu0 0.0
    %846 = vmatpush1.msra.mxu0 0.0
    %847 = vmatprep.subr.mxu0 0.0
    %848 = vmatpush1.msra.mxu0 0.0
    %849 = vmatprep.subr.mxu0 0.0
    %850 = vmatpush1.msra.mxu0 0.0
    %851 = vmatprep.subr.mxu0 0.0
    %852 = vmatpush1.msra.mxu0 0.0
    %853 = vmatprep.subr.mxu0 0.0
    %854 = vmatpush1.msra.mxu0 0.0
    %855 = vmatprep.subr.mxu0 0.0
    %856 = vmatpush1.msra.mxu0 0.0
    %857 = vmatprep.subr.mxu0 0.0
    %858 = vmatpush1.msra.mxu0 0.0
    %859 = vmatprep.subr.mxu0 0.0
    %860 = vmatpush1.msra.mxu0 0.0
    %861 = vmatprep.subr.mxu0 0.0
    %862 = vmatpush1.msra.mxu0 0.0
    %863 = vmatprep.subr.mxu0 0.0
    %864 = vmatpush1.msra.mxu0 0.0
    %865 = vmatprep.subr.mxu0 0.0
    %866 = vmatpush1.msra.mxu0 0.0
    %867 = vmatprep.subr.mxu0 0.0
    %868 = vmatpush1.msra.mxu0 0.0
    %869 = vmatprep.subr.mxu0 0.0
    %870 = vmatpush1.msra.mxu0 0.0
    %871 = vmatprep.subr.mxu0 0.0
    %872 = vmatpush1.msra.mxu0 0.0
    %873 = vmatprep.subr.mxu0 0.0
    %874 = vmatpush1.msra.mxu0 0.0
    %875 = vmatprep.subr.mxu0 0.0
    %876 = vmatpush1.msra.mxu0 0.0
    %877 = vmatprep.subr.mxu0 0.0
    %878 = vmatpush1.msra.mxu0 0.0
    %879 = vmatprep.subr.mxu0 0.0
    %880 = vmatpush1.msra.mxu0 0.0
    %881 = vmatprep.subr.mxu0 0.0
    %882 = vmatpush1.msra.mxu0 0.0
    %883 = vmatprep.subr.mxu0 0.0
    %884 = vmatpush1.msra.mxu0 0.0
    %885 = vmatprep.mubr.f32.mxu0 0.0
    %886 = vmatmul.mubr.f32.gmra.mrb[0].mxu0 %v819
    %v887 = vpop.f32.mrb[0].mxu0
    %v888 = vadd.f32 0.0, %v887
    %v889 = vpop.f32.mrb[0].mxu0
    %890 = vdwg.mxu0
    %v891 = vsel %vm140, %v888, 0.0
    %892 = vadd.xlane.f32.xlu0 %v891
    %v893 = vpop.xlane.xlu0 %892
    %v894 = vmul.f32 %v893, %v144
    %v895 = vsub.f32 %v888, %v894
    %v896 = vadd.f32 %v817, %v895
    %s897 = scalar_lea.vmem %s4, 12
    %898 = vst.msk [vmem:[%s897] sm:$0x3] %vm140, %v896
    %s899 = scalar_lea.vmem %s1, 448
    %v900 = vld [vmem:[%s899] sm:$0xff]
    %v901 = vld [vmem:[%s899 + $0x8] sm:$0xff]
    %v902 = vld [vmem:[%s899 + $0x10] sm:$0xff]
    %v903 = vld [vmem:[%s899 + $0x18] sm:$0xff]
    %v904 = vld [vmem:[%s899 + $0x20] sm:$0xff]
    %v905 = vld [vmem:[%s899 + $0x28] sm:$0xff]
    %v906 = vld [vmem:[%s899 + $0x30] sm:$0xff]
    %v907 = vld [vmem:[%s899 + $0x38] sm:$0xff]
    %v908 = vadd.f32 %v900, %v17
    %v909 = vadd.f32 %v901, %v18
    %v910 = vadd.f32 %v902, %v19
    %v911 = vadd.f32 %v903, %v20
    %v912 = vadd.f32 %v904, %v21
    %v913 = vadd.f32 %v905, %v22
    %v914 = vadd.f32 %v906, %v23
    %v915 = vadd.f32 %v907, %v24
    %v916 = vmax.f32 %v908, -1.0
    %v917 = vmax.f32 %v909, -1.0
    %v918 = vmax.f32 %v910, -1.0
    %v919 = vmax.f32 %v911, -1.0
    %v920 = vmax.f32 %v912, -1.0
    %v921 = vmax.f32 %v913, -1.0
    %v922 = vmax.f32 %v914, -1.0
    %v923 = vmax.f32 %v915, -1.0
    %v924 = vmin.f32 %v916, 1.0
    %v925 = vmin.f32 %v917, 1.0
    %v926 = vmin.f32 %v918, 1.0
    %v927 = vmin.f32 %v919, 1.0
    %v928 = vmin.f32 %v920, 1.0
    %v929 = vmin.f32 %v921, 1.0
    %v930 = vmin.f32 %v922, 1.0
    %v931 = vmin.f32 %v923, 1.0
    %s932 = scalar_lea.vmem [#allocation2], 448
    %933 = vst.msk [vmem:[%s932] sm:$0xff] %vm57, %v924
    %934 = vst.msk [vmem:[%s932 + $0x8] sm:$0xff] %vm57, %v925
    %935 = vst.msk [vmem:[%s932 + $0x10] sm:$0xff] %vm57, %v926
    %936 = vst.msk [vmem:[%s932 + $0x18] sm:$0xff] %vm57, %v927
    %937 = vst.msk [vmem:[%s932 + $0x20] sm:$0xff] %vm57, %v928
    %938 = vst.msk [vmem:[%s932 + $0x28] sm:$0xff] %vm57, %v929
    %939 = vst.msk [vmem:[%s932 + $0x30] sm:$0xff] %vm57, %v930
    %940 = vst.msk [vmem:[%s932 + $0x38] sm:$0xff] %vm57, %v931
    %s941 = scalar_lea.vmem %s0, 14
    %v942 = vld [vmem:[%s941] sm:$0x3]
    %v944 = vsel %vm57, %v942, 0
    %946 = vmatprep.subr.mxu0 0.0
    %947 = vmatpush1.msra.mxu0 %v924
    %948 = vmatprep.subr.mxu0 0.0
    %949 = vmatpush1.msra.mxu0 %v925
    %950 = vmatprep.subr.mxu0 0.0
    %951 = vmatpush1.msra.mxu0 %v926
    %952 = vmatprep.subr.mxu0 0.0
    %953 = vmatpush1.msra.mxu0 %v927
    %954 = vmatprep.subr.mxu0 0.0
    %955 = vmatpush1.msra.mxu0 %v928
    %956 = vmatprep.subr.mxu0 0.0
    %957 = vmatpush1.msra.mxu0 %v929
    %958 = vmatprep.subr.mxu0 0.0
    %959 = vmatpush1.msra.mxu0 %v930
    %960 = vmatprep.subr.mxu0 0.0
    %961 = vmatpush1.msra.mxu0 %v931
    %962 = vmatprep.subr.mxu0 0.0
    %963 = vmatpush1.msra.mxu0 0.0
    %964 = vmatprep.subr.mxu0 0.0
    %965 = vmatpush1.msra.mxu0 0.0
    %966 = vmatprep.subr.mxu0 0.0
    %967 = vmatpush1.msra.mxu0 0.0
    %968 = vmatprep.subr.mxu0 0.0
    %969 = vmatpush1.msra.mxu0 0.0
    %970 = vmatprep.subr.mxu0 0.0
    %971 = vmatpush1.msra.mxu0 0.0
    %972 = vmatprep.subr.mxu0 0.0
    %973 = vmatpush1.msra.mxu0 0.0
    %974 = vmatprep.subr.mxu0 0.0
    %975 = vmatpush1.msra.mxu0 0.0
    %976 = vmatprep.subr.mxu0 0.0
    %977 = vmatpush1.msra.mxu0 0.0
    %978 = vmatprep.subr.mxu0 0.0
    %979 = vmatpush1.msra.mxu0 0.0
    %980 = vmatprep.subr.mxu0 0.0
    %981 = vmatpush1.msra.mxu0 0.0
    %982 = vmatprep.subr.mxu0 0.0
    %983 = vmatpush1.msra.mxu0 0.0
    %984 = vmatprep.subr.mxu0 0.0
    %985 = vmatpush1.msra.mxu0 0.0
    %986 = vmatprep.subr.mxu0 0.0
    %987 = vmatpush1.msra.mxu0 0.0
    %988 = vmatprep.subr.mxu0 0.0
    %989 = vmatpush1.msra.mxu0 0.0
    %990 = vmatprep.subr.mxu0 0.0
    %991 = vmatpush1.msra.mxu0 0.0
    %992 = vmatprep.subr.mxu0 0.0
    %993 = vmatpush1.msra.mxu0 0.0
    %994 = vmatprep.subr.mxu0 0.0
    %995 = vmatpush1.msra.mxu0 0.0
    %996 = vmatprep.subr.mxu0 0.0
    %997 = vmatpush1.msra.mxu0 0.0
    %998 = vmatprep.subr.mxu0 0.0
    %999 = vmatpush1.msra.mxu0 0.0
    %1000 = vmatprep.subr.mxu0 0.0
    %1001 = vmatpush1.msra.mxu0 0.0
    %1002 = vmatprep.subr.mxu0 0.0
    %1003 = vmatpush1.msra.mxu0 0.0
    %1004 = vmatprep.subr.mxu0 0.0
    %1005 = vmatpush1.msra.mxu0 0.0
    %1006 = vmatprep.subr.mxu0 0.0
    %1007 = vmatpush1.msra.mxu0 0.0
    %1008 = vmatprep.subr.mxu0 0.0
    %1009 = vmatpush1.msra.mxu0 0.0
    %1010 = vmatprep.mubr.f32.mxu0 0.0
    %1011 = vmatmul.mubr.f32.gmra.mrb[0].mxu0 %v944
    %v1012 = vpop.f32.mrb[0].mxu0
    %v1013 = vadd.f32 0.0, %v1012
    %v1014 = vpop.f32.mrb[0].mxu0
    %1015 = vdwg.mxu0
    %v1016 = vsel %vm140, %v1013, 0.0
    %1017 = vadd.xlane.f32.xlu0 %v1016
    %v1018 = vpop.xlane.xlu0 %1017
    %v1019 = vmul.f32 %v1018, %v144
    %v1020 = vsub.f32 %v1013, %v1019
    %v1021 = vadd.f32 %v942, %v1020
    %s1022 = scalar_lea.vmem %s4, 14
    %1023 = vst.msk [vmem:[%s1022] sm:$0x3] %vm140, %v1021
    // Predicated region
    $region14: #{hebbian_encoder_forward.3} parent=1 // pred_check
      _
    $region15: #{hebbian_encoder_forward.3} parent=1 // pred_check_branch
      %1025 = sbr.rel (0) target = $region17
    $region16: #{hebbian_encoder_forward.3} parent=1 // pred_region
      %s1027 = ssub.s32 8192, 8192
      %1028 = vsyncadd [#allocation3], %s1027
      %s1029 = sshll.u32 [#allocation2], 4
      %s1030 = int_to_ptr.vmem [resolvable:$true] %s1029
      %1035 = dma.vmem_to_hbm [thread:$0]  %s1030, 8192, %s3, [#allocation3], 128, 128, 8
    $region17: #{hebbian_encoder_forward.3} parent=1 // pred_fallthru
      _
    // Predicated region
    $region18: #{hebbian_encoder_forward.3} parent=1 // pred_check
      _
    $region19: #{hebbian_encoder_forward.3} parent=1 // pred_check_branch
      %1037 = sbr.rel (0) target = $region21
    $region20: #{hebbian_encoder_forward.3} parent=1 // pred_region
      _
    $region21: #{hebbian_encoder_forward.3} parent=1 // pred_fallthru
      _
    // Predicated region
    $region22: #{hebbian_encoder_forward.3} parent=1 // pred_check
      _
    $region23: #{hebbian_encoder_forward.3} parent=1 // pred_check_branch
      %1039 = sbr.rel (0) target = $region25
    $region24: #{hebbian_encoder_forward.3} parent=1 // pred_region
      %1040 = dma.done [#allocation3], 8192
    $region25: #{hebbian_encoder_forward.3} parent=1 // pred_fallthru
      _
    // Predicated region
    $region26: #{hebbian_encoder_forward.3} parent=1 // pred_check
      _
    $region27: #{hebbian_encoder_forward.3} parent=1 // pred_check_branch
      %1042 = sbr.rel (0) target = $region29
    $region28: #{hebbian_encoder_forward.3} parent=1 // pred_region
      _
    $region29: #{hebbian_encoder_forward.3} parent=1 // pred_fallthru
      _
    %1043 = vsyncpa [#allocation3], 1

</llo_original>
